<compile_context>
chip_gen: v7x
topology: tpu7x:2x2x1
jax: 0.10.0
libtpu: 0.0.40
codegen_flags: <defaults>
</compile_context>

<pallas_src>
import functools

import jax
import jax.numpy as jnp
from jax.experimental import pallas as pl
from jax.experimental.pallas import tpu as pltpu


# -----------------------------------------------------------------------------
# Fused GhostConv kernel (one grid step = one batch element x one TH-row tile)
#   x_ref : (1, C1, H, W)      full image for batch n (VMEM-resident across t)
#   w1_ref: (C_, 1, C1)        1x1 conv weights, BN scale folded in
#   b1_ref: (C_, 1, 1)         BN bias of cv1
#   w2_ref: (C_, 1, 25)        depthwise 5x5 weights (k = kh*5+kw), BN scale folded
#   b2_ref: (C_, 1, 1)         BN bias of cv2
#   o_ref : (1, 2*C_, TH*W)    lane-dense output tile ([cv1(x) ; cv2(cv1(x))])
#   yp_ref: (C_, TH+8, W+4)    persistent VMEM scratch: padded y tile
#                              (yp row j holds image row r0 - 4 + j)
# -----------------------------------------------------------------------------
def _ghost_kernel(x_ref, w1_ref, b1_ref, w2_ref, b2_ref, o_ref, yp_ref, *, use_mxu):
    C_, _, C1 = w1_ref.shape
    _, _, H, W = x_ref.shape
    TH = o_ref.shape[2] // W          # rows per tile (output block is TH*W lanes)
    NR = min(TH + 4, H)               # cv1 rows computed per step (tile + 5x5 halo)

    t = pl.program_id(1)
    nt = pl.num_programs(1)
    r0 = t * TH                       # first image row of this tile

    # ---- zero only the padding the 5x5 window can read -----------------------
    # The depthwise window reads yp rows 2..TH+5 and all W+4 columns.  The scratch
    # persists across grid steps, so:
    #   * left/right 2-col borders: zeroed once per core (t==0 is each core's first
    #     step because the t axis is "arbitrary", never split across TensorCores)
    #     and never overwritten afterwards (slab stores only touch cols 2..W+1),
    #   * top/bottom 2-row image borders: re-zeroed at every edge tile, because
    #     interior tiles legitimately overwrite them with halo data.
    @pl.when(t == 0)
    def _():
        yp_ref[:, :, 0:2] = jnp.zeros((C_, TH + 8, 2), jnp.float32)
        yp_ref[:, :, 2 + W:4 + W] = jnp.zeros((C_, TH + 8, 2), jnp.float32)
        yp_ref[:, 2:4, :] = jnp.zeros((C_, 2, W + 4), jnp.float32)

    @pl.when(t == nt - 1)
    def _():
        yp_ref[:, TH + 4:TH + 6, :] = jnp.zeros((C_, 2, W + 4), jnp.float32)

    # ---- cv1: 1x1 conv (BN scale folded into w1) + bias + SiLU ----------------
    # One slab of NR rows covering the tile plus its clamped 2-row halos
    # (single matmul instead of main + two underfilled 2-row halo computes).
    rs = jnp.minimum(jnp.maximum(r0 - 2, 0), H - NR)   # slab start row
    rs = pl.multiple_of(rs, 2)
    x_slab = x_ref[0, :, pl.ds(rs, NR), :].astype(jnp.float32)     # (C1, NR, W)
    b1 = b1_ref[...]                                               # (C_, 1, 1)
    if use_mxu:
        # MXU path: (C_, C1) x (C1, NR*W), f32 accumulation.
        w1 = w1_ref[:, 0, :]                                       # (C_, C1)
        z = jnp.dot(w1, x_slab.reshape(C1, NR * W),
                    preferred_element_type=jnp.float32)
        z = z.reshape(C_, NR, W) + b1
    else:
        # Tiny-channel fallback (demo sizes): VPU broadcast-MAC over C1.
        w1 = w1_ref[...]                                           # (C_, 1, C1)
        z = jnp.zeros((C_, NR, W), jnp.float32)
        for k in range(C1):
            z = z + x_slab[k][None, :, :] * w1[:, :, k:k + 1]
        z = z + b1
    y_slab = z * jax.nn.sigmoid(z)                                 # SiLU, (C_, NR, W)

    # Store at the right row offset (0, 2 or 4 depending on edge clamping).
    dst = pl.multiple_of(rs - r0 + 4, 2)
    yp_ref[:, pl.ds(dst, NR), 2:2 + W] = y_slab

    # ---- cv2: depthwise 5x5 (BN folded into w2) + bias + SiLU -----------------
    # Read the padded window once, hoist the 5 kw lane shifts, then take cheap kh
    # sublane slices inside the loop (5 lane shifts instead of 25 unaligned taps).
    # NOTE: the (C_, TH+4, W+4) window and its 5 shifted copies live in vregs/VMEM
    # values; keep an eye on vreg pressure if C_ * TH * W is pushed very large.
    w2 = w2_ref[...]                                               # (C_, 1, 25)
    b2 = b2_ref[...]                                               # (C_, 1, 1)
    ypad = yp_ref[:, 2:TH + 6, :]                                  # (C_, TH+4, W+4)
    acc = jnp.zeros((C_, TH, W), jnp.float32)
    for kw in range(5):
        col = ypad[:, :, kw:kw + W]                                # (C_, TH+4, W)
        for kh in range(5):
            k = kh * 5 + kw
            acc = acc + col[:, kh:kh + TH, :] * w2[:, :, k:k + 1]
    z2 = acc + b2
    y2 = z2 * jax.nn.sigmoid(z2)                                   # (C_, TH, W)

    # ---- fused channel concat, lane-dense (TH*W wide) stores ------------------
    y_main = yp_ref[:, 4:4 + TH, 2:2 + W]                          # cv1(x), main rows
    o_ref[0, 0:C_, :] = y_main.reshape(C_, TH * W).astype(o_ref.dtype)
    o_ref[0, C_:2 * C_, :] = y2.reshape(C_, TH * W).astype(o_ref.dtype)


# -----------------------------------------------------------------------------
# Host-side wrapper
# -----------------------------------------------------------------------------
def fold_bn(gamma, beta, mean, var, eps=1e-5):
    scale = gamma / jnp.sqrt(var + eps)
    return scale, beta - mean * scale


def _vmem_bytes(C1, C_, H, W, TH, itemsize):
    x_buf = 2 * C1 * H * W * itemsize                  # x block (double-buffered)
    out_buf = 2 * 2 * C_ * TH * W * itemsize           # output block (double-buffered)
    weights = 2 * 4 * (C_ * C1 + 27 * C_)
    scratch = 4 * C_ * (TH + 8) * (W + 4)              # persistent yp (f32)
    transient = 4 * ((C1 + 2 * C_) * (TH + 4) * W      # cv1 slab in/out
                     + 7 * C_ * (TH + 4) * (W + 4))    # shifted copies, acc, headroom
    return x_buf + out_buf + weights + scratch + transient


def _pick_tile_rows(C1, C_, H, W, itemsize, max_tile_rows, budget):
    """Largest TH (multiple of 8, divisor of H, TH*W lane-dense) under the budget."""
    cands = [th for th in range(8, H + 1, 8)
             if H % th == 0 and (th * W) % 128 == 0]
    if max_tile_rows is not None:
        cands = [th for th in cands if th <= max_tile_rows] or cands
    if not cands:
        return H                                        # whole image per step
    fit = [th for th in cands if _vmem_bytes(C1, C_, H, W, th, itemsize) <= budget]
    if not fit:
        return cands[0]
    pref = [th for th in fit if (th * W) % 256 == 0]    # fill the 256-wide v6e/v7x MXU
    return (pref or fit)[-1]


def ghost_conv(x, params, *, max_tile_rows=None, vmem_budget=40 << 20):
    """GhostConv forward (module defaults k=1, s=1, g=1, act=SiLU), NCHW -> NCHW."""
    # TODO(synk): only the GhostConv defaults (cv1 k=1, s=1, g=1) are implemented.
    N, C1, H, W = x.shape
    w1, w2 = params["w1"], params["w2"]                 # (C_, C1), (C_, 5, 5)
    C_ = w1.shape[0]

    # Fold eval-mode BN scale into the conv weights; only biases enter the kernel.
    s1, b1 = fold_bn(*params["bn1"])
    s2, b2 = fold_bn(*params["bn2"])
    w1f = (w1 * s1[:, None]).reshape(C_, 1, C1).astype(jnp.float32)
    w2f = (w2 * s2[:, None, None]).reshape(C_, 1, 25).astype(jnp.float32)
    b1f = b1.reshape(C_, 1, 1).astype(jnp.float32)
    b2f = b2.reshape(C_, 1, 1).astype(jnp.float32)

    itemsize = x.dtype.itemsize
    TH = _pick_tile_rows(C1, C_, H, W, itemsize, max_tile_rows, vmem_budget)
    grid = (N, H // TH)
    use_mxu = (C1 * C_) >= 256        # VPU broadcast-MAC only for tiny channel counts
    vmem_limit = int(min(max(2 * _vmem_bytes(C1, C_, H, W, TH, itemsize), 32 << 20),
                         48 << 20))   # <= 48 MiB keeps v7x's 64 MiB physical VMEM safe

    out_flat = pl.pallas_call(
        functools.partial(_ghost_kernel, use_mxu=use_mxu),
        out_shape=jax.ShapeDtypeStruct((N, 2 * C_, H * W), x.dtype),
        grid_spec=pltpu.PrefetchScalarGridSpec(
            num_scalar_prefetch=0,
            grid=grid,
            in_specs=[
                # x stays VMEM-resident while the row-tile index t varies.
                pl.BlockSpec((1, C1, H, W), lambda n, t: (n, 0, 0, 0)),
                pl.BlockSpec((C_, 1, C1), lambda n, t: (0, 0, 0)),
                pl.BlockSpec((C_, 1, 1), lambda n, t: (0, 0, 0)),
                pl.BlockSpec((C_, 1, 25), lambda n, t: (0, 0, 0)),
                pl.BlockSpec((C_, 1, 1), lambda n, t: (0, 0, 0)),
            ],
            # Lane-dense output: (H, W) flattened to H*W so each store is TH*W
            # (>=128) lanes wide instead of W (<128) masked lanes.
            out_specs=pl.BlockSpec((1, 2 * C_, TH * W), lambda n, t: (n, 0, t)),
            scratch_shapes=[pltpu.VMEM((C_, TH + 8, W + 4), jnp.float32)],
        ),
        compiler_params=pltpu.CompilerParams(
            # Batch is the megacore axis (splitting t across v7x's two cores would
            # make both DMA the full image); t stays "arbitrary", which also keeps
            # the persistent-scratch init at t==0 valid on every core.
            dimension_semantics=("parallel", "arbitrary"),
            vmem_limit_bytes=vmem_limit,
        ),
    )(x, w1f, b1f, w2f, b2f)
    return out_flat.reshape(N, 2 * C_, H, W)


# -----------------------------------------------------------------------------
# Parameters and pure-JAX reference (for correctness checking)
# -----------------------------------------------------------------------------
def init_params(key, c1, c2):
    c_ = c2 // 2
    ks = jax.random.split(key, 8)
    w1 = jax.random.normal(ks[0], (c_, c1), jnp.float32) * 0.1     # (c_, c1, 1, 1)
    w2 = jax.random.normal(ks[1], (c_, 5, 5), jnp.float32) * 0.1   # (c_, 1, 5, 5)
    bn1 = (jax.random.uniform(ks[2], (c_,), jnp.float32, 0.5, 1.5),  # gamma
           jax.random.normal(ks[3], (c_,), jnp.float32) * 0.1,       # beta
           jax.random.normal(ks[4], (c_,), jnp.float32) * 0.1,       # running mean
           jax.random.uniform(ks[5], (c_,), jnp.float32, 0.5, 1.5))  # running var
    bn2 = (jax.random.uniform(ks[6], (c_,), jnp.float32, 0.5, 1.5),
           jax.random.normal(ks[7], (c_,), jnp.float32) * 0.1,
           jnp.zeros((c_,), jnp.float32),
           jnp.ones((c_,), jnp.float32))
    return {"w1": w1, "w2": w2, "bn1": bn1, "bn2": bn2}


def ghost_conv_ref(x, params):
    w1, w2 = params["w1"], params["w2"]
    C_ = w1.shape[0]
    s1, b1 = fold_bn(*params["bn1"])
    s2, b2 = fold_bn(*params["bn2"])
    y = jax.lax.conv_general_dilated(
        x, w1[:, :, None, None], (1, 1), "VALID",
        dimension_numbers=("NCHW", "OIHW", "NCHW"))
    y = jax.nn.silu(y * s1[None, :, None, None] + b1[None, :, None, None])
    y2 = jax.lax.conv_general_dilated(
        y, w2[:, None, :, :], (1, 1), ((2, 2), (2, 2)),
        dimension_numbers=("NCHW", "OIHW", "NCHW"), feature_group_count=C_)
    y2 = jax.nn.silu(y2 * s2[None, :, None, None] + b2[None, :, None, None])
    return jnp.concatenate([y, y2], axis=1)


if __name__ == "__main__":
    def _run(key, n, c1, h, w, c2, max_tile_rows):
        kx, kp = jax.random.split(key)
        x = jax.random.normal(kx, (n, c1, h, w), jnp.float32)
        params = init_params(kp, c1, c2)
        out = jax.jit(functools.partial(ghost_conv, max_tile_rows=max_tile_rows))(x, params)
        out = jax.block_until_ready(out)
        assert out.shape == (n, c2, h, w), out.shape
        ref = ghost_conv_ref(x, params)
        err = float(jnp.max(jnp.abs(out - ref)))
        assert err < 2e-3, f"max abs err {err}"

    k1, k2 = jax.random.split(jax.random.PRNGKey(0))
    # Small shapes (VPU cv1 fallback), 2 row tiles per image -> both edge-tile paths.
    _run(k1, n=2, c1=4, h=16, w=16, c2=8, max_tile_rows=8)
    # Larger channel count (MXU cv1 path), 4 row tiles -> edge + interior tiles.
    _run(k2, n=1, c1=32, h=32, w=32, c2=32, max_tile_rows=8)
    print("KERNEL_OK")
</pallas_src>

<mosaic_0001>
module attributes {stable_mosaic.version = 11 : i64} {
  func.func @_ghost_kernel(%arg0: i32, %arg1: i32, %arg2: memref<1x4x16x16xf32, #tpu.memory_space<vmem>>, %arg3: memref<4x1x4xf32, #tpu.memory_space<vmem>>, %arg4: memref<4x1x1xf32, #tpu.memory_space<vmem>>, %arg5: memref<4x1x25xf32, #tpu.memory_space<vmem>>, %arg6: memref<4x1x1xf32, #tpu.memory_space<vmem>>, %arg7: memref<1x8x128xf32, #tpu.memory_space<vmem>>, %arg8: memref<4x16x20xf32, #tpu.memory_space<vmem>>) attributes {dimension_semantics = [#tpu.dimension_semantics<parallel>, #tpu.dimension_semantics<arbitrary>], iteration_bounds = array<i64: 2, 2>, scalar_prefetch = 0 : i64, scratch_operands = 1 : i64, tpu.core_type = #tpu.core_type<tc>, window_params = [{transform_indices = @transform_0, window_bounds = array<i64: 1, 4, 16, 16>}, {pipeline_mode = #tpu.pipeline_mode<synchronous>, transform_indices = @transform_1, window_bounds = array<i64: 4, 1, 4>}, {pipeline_mode = #tpu.pipeline_mode<synchronous>, transform_indices = @transform_2, window_bounds = array<i64: 4, 1, 1>}, {pipeline_mode = #tpu.pipeline_mode<synchronous>, transform_indices = @transform_3, window_bounds = array<i64: 4, 1, 25>}, {pipeline_mode = #tpu.pipeline_mode<synchronous>, transform_indices = @transform_4, window_bounds = array<i64: 4, 1, 1>}, {transform_indices = @transform_5, window_bounds = array<i64: 1, 8, 128>}]} {
    %c8_i32 = arith.constant 8 : i32
    %0 = arith.muli %arg1, %c8_i32 : i32
    %c0_i32 = arith.constant 0 : i32
    %1 = arith.cmpi eq, %arg1, %c0_i32 : i32
    %2 = arith.extui %1 : i1 to i32
    %c0_i32_0 = arith.constant 0 : i32
    %3 = arith.cmpi ne, %2, %c0_i32_0 : i32
    scf.if %3 {
      %cst_33 = arith.constant 0.000000e+00 : f32
      %213 = vector.broadcast %cst_33 : f32 to vector<4x16x2xf32>
      %c0_34 = arith.constant 0 : index
      %c0_35 = arith.constant 0 : index
      %c0_36 = arith.constant 0 : index
      %214 = vector.load %arg8[%c0_34, %c0_35, %c0_36] : memref<4x16x20xf32, #tpu.memory_space<vmem>>, vector<4x16x2xf32>
      tpu.vector_store %arg8[%c0_34, %c0_35, %c0_36], %213 {strides = array<i32>} : memref<4x16x20xf32, #tpu.memory_space<vmem>>, vector<4x16x2xf32>,
      %cst_37 = arith.constant 0.000000e+00 : f32
      %215 = vector.broadcast %cst_37 : f32 to vector<4x16x2xf32>
      %c0_38 = arith.constant 0 : index
      %c0_39 = arith.constant 0 : index
      %c18 = arith.constant 18 : index
      %216 = vector.load %arg8[%c0_38, %c0_39, %c18] : memref<4x16x20xf32, #tpu.memory_space<vmem>>, vector<4x16x2xf32>
      tpu.vector_store %arg8[%c0_38, %c0_39, %c18], %215 {strides = array<i32>} : memref<4x16x20xf32, #tpu.memory_space<vmem>>, vector<4x16x2xf32>,
      %cst_40 = arith.constant 0.000000e+00 : f32
      %217 = vector.broadcast %cst_40 : f32 to vector<4x2x20xf32>
      %c0_41 = arith.constant 0 : index
      %c2_42 = arith.constant 2 : index
      %c0_43 = arith.constant 0 : index
      %218 = vector.load %arg8[%c0_41, %c2_42, %c0_43] : memref<4x16x20xf32, #tpu.memory_space<vmem>>, vector<4x2x20xf32>
      tpu.vector_store %arg8[%c0_41, %c2_42, %c0_43], %217 {strides = array<i32>} : memref<4x16x20xf32, #tpu.memory_space<vmem>>, vector<4x2x20xf32>,
    } else {
    }
    %c1_i32 = arith.constant 1 : i32
    %4 = arith.cmpi eq, %arg1, %c1_i32 : i32
    %5 = arith.extui %4 : i1 to i32
    %c0_i32_1 = arith.constant 0 : i32
    %6 = arith.cmpi ne, %5, %c0_i32_1 : i32
    scf.if %6 {
      %cst_33 = arith.constant 0.000000e+00 : f32
      %213 = vector.broadcast %cst_33 : f32 to vector<4x2x20xf32>
      %c0_34 = arith.constant 0 : index
      %c12 = arith.constant 12 : index
      %c0_35 = arith.constant 0 : index
      %214 = vector.load %arg8[%c0_34, %c12, %c0_35] : memref<4x16x20xf32, #tpu.memory_space<vmem>>, vector<4x2x20xf32>
      tpu.vector_store %arg8[%c0_34, %c12, %c0_35], %213 {strides = array<i32>} : memref<4x16x20xf32, #tpu.memory_space<vmem>>, vector<4x2x20xf32>,
    } else {
    }
    %c2_i32 = arith.constant 2 : i32
    %7 = arith.subi %0, %c2_i32 : i32
    %c0_i32_2 = arith.constant 0 : i32
    %8 = arith.maxsi %7, %c0_i32_2 : i32
    %c4_i32 = arith.constant 4 : i32
    %9 = arith.minsi %8, %c4_i32 : i32
    %10 = tpu.assume_multiple %9, 2 : i32
    %c0 = arith.constant 0 : index
    %c0_3 = arith.constant 0 : index
    %11 = arith.index_cast %10 : i32 to index
    %c0_4 = arith.constant 0 : index
    %12 = vector.load %arg2[%c0, %c0_3, %11, %c0_4] : memref<1x4x16x16xf32, #tpu.memory_space<vmem>>, vector<1x4x12x16xf32>
    %13 = vector.shape_cast %12 : vector<1x4x12x16xf32> to vector<4x12x16xf32>
    %c0_5 = arith.constant 0 : index
    %c0_6 = arith.constant 0 : index
    %c0_7 = arith.constant 0 : index
    %14 = vector.load %arg4[%c0_5, %c0_6, %c0_7] : memref<4x1x1xf32, #tpu.memory_space<vmem>>, vector<4x1x1xf32>
    %c0_8 = arith.constant 0 : index
    %c0_9 = arith.constant 0 : index
    %c0_10 = arith.constant 0 : index
    %15 = vector.load %arg3[%c0_8, %c0_9, %c0_10] : memref<4x1x4xf32, #tpu.memory_space<vmem>>, vector<4x1x4xf32>
    %cst = arith.constant 0.000000e+00 : f32
    %16 = vector.broadcast %cst : f32 to vector<4x12x16xf32>
    %17 = vector.extract_strided_slice %13 {offsets = [0, 0, 0], sizes = [1, 12, 16], strides = [1, 1, 1]} : vector<4x12x16xf32> to vector<1x12x16xf32>
    %18 = vector.shape_cast %17 : vector<1x12x16xf32> to vector<12x16xf32>
    %19 = vector.shape_cast %18 : vector<12x16xf32> to vector<1x12x16xf32>
    %20 = vector.extract_strided_slice %15 {offsets = [0, 0, 0], sizes = [4, 1, 1], strides = [1, 1, 1]} : vector<4x1x4xf32> to vector<4x1x1xf32>
    %21 = vector.broadcast %19 : vector<1x12x16xf32> to vector<4x12x16xf32>
    %22 = vector.broadcast %20 : vector<4x1x1xf32> to vector<4x12x16xf32>
    %23 = arith.mulf %21, %22 : vector<4x12x16xf32>
    %24 = arith.addf %16, %23 : vector<4x12x16xf32>
    %25 = vector.extract_strided_slice %13 {offsets = [1, 0, 0], sizes = [1, 12, 16], strides = [1, 1, 1]} : vector<4x12x16xf32> to vector<1x12x16xf32>
    %26 = vector.shape_cast %25 : vector<1x12x16xf32> to vector<12x16xf32>
    %27 = vector.shape_cast %26 : vector<12x16xf32> to vector<1x12x16xf32>
    %28 = vector.extract_strided_slice %15 {offsets = [0, 0, 1], sizes = [4, 1, 1], strides = [1, 1, 1]} : vector<4x1x4xf32> to vector<4x1x1xf32>
    %29 = vector.broadcast %27 : vector<1x12x16xf32> to vector<4x12x16xf32>
    %30 = vector.broadcast %28 : vector<4x1x1xf32> to vector<4x12x16xf32>
    %31 = arith.mulf %29, %30 : vector<4x12x16xf32>
    %32 = arith.addf %24, %31 : vector<4x12x16xf32>
    %33 = vector.extract_strided_slice %13 {offsets = [2, 0, 0], sizes = [1, 12, 16], strides = [1, 1, 1]} : vector<4x12x16xf32> to vector<1x12x16xf32>
    %34 = vector.shape_cast %33 : vector<1x12x16xf32> to vector<12x16xf32>
    %35 = vector.shape_cast %34 : vector<12x16xf32> to vector<1x12x16xf32>
    %36 = vector.extract_strided_slice %15 {offsets = [0, 0, 2], sizes = [4, 1, 1], strides = [1, 1, 1]} : vector<4x1x4xf32> to vector<4x1x1xf32>
    %37 = vector.broadcast %35 : vector<1x12x16xf32> to vector<4x12x16xf32>
    %38 = vector.broadcast %36 : vector<4x1x1xf32> to vector<4x12x16xf32>
    %39 = arith.mulf %37, %38 : vector<4x12x16xf32>
    %40 = arith.addf %32, %39 : vector<4x12x16xf32>
    %41 = vector.extract_strided_slice %13 {offsets = [3, 0, 0], sizes = [1, 12, 16], strides = [1, 1, 1]} : vector<4x12x16xf32> to vector<1x12x16xf32>
    %42 = vector.shape_cast %41 : vector<1x12x16xf32> to vector<12x16xf32>
    %43 = vector.shape_cast %42 : vector<12x16xf32> to vector<1x12x16xf32>
    %44 = vector.extract_strided_slice %15 {offsets = [0, 0, 3], sizes = [4, 1, 1], strides = [1, 1, 1]} : vector<4x1x4xf32> to vector<4x1x1xf32>
    %45 = vector.broadcast %43 : vector<1x12x16xf32> to vector<4x12x16xf32>
    %46 = vector.broadcast %44 : vector<4x1x1xf32> to vector<4x12x16xf32>
    %47 = arith.mulf %45, %46 : vector<4x12x16xf32>
    %48 = arith.addf %40, %47 : vector<4x12x16xf32>
    %49 = vector.broadcast %14 : vector<4x1x1xf32> to vector<4x12x16xf32>
    %50 = arith.addf %48, %49 : vector<4x12x16xf32>
    %51 = arith.negf %50 : vector<4x12x16xf32>
    %52 = math.exp %51 : vector<4x12x16xf32>
    %cst_11 = arith.constant 1.000000e+00 : f32
    %53 = vector.broadcast %cst_11 : f32 to vector<4x12x16xf32>
    %54 = arith.addf %53, %52 : vector<4x12x16xf32>
    %55 = arith.divf %53, %54 : vector<4x12x16xf32>
    %56 = arith.mulf %50, %55 : vector<4x12x16xf32>
    %57 = arith.subi %10, %0 : i32
    %c4_i32_12 = arith.constant 4 : i32
    %58 = arith.addi %57, %c4_i32_12 : i32
    %59 = tpu.assume_multiple %58, 2 : i32
    %c0_13 = arith.constant 0 : index
    %60 = arith.index_cast %59 : i32 to index
    %c2 = arith.constant 2 : index
    %61 = vector.load %arg8[%c0_13, %60, %c2] : memref<4x16x20xf32, #tpu.memory_space<vmem>>, vector<4x12x16xf32>
    tpu.vector_store %arg8[%c0_13, %60, %c2], %56 {strides = array<i32>} : memref<4x16x20xf32, #tpu.memory_space<vmem>>, vector<4x12x16xf32>,
    %c0_14 = arith.constant 0 : index
    %c0_15 = arith.constant 0 : index
    %c0_16 = arith.constant 0 : index
    %62 = vector.load %arg5[%c0_14, %c0_15, %c0_16] : memref<4x1x25xf32, #tpu.memory_space<vmem>>, vector<4x1x25xf32>
    %c0_17 = arith.constant 0 : index
    %c0_18 = arith.constant 0 : index
    %c0_19 = arith.constant 0 : index
    %63 = vector.load %arg6[%c0_17, %c0_18, %c0_19] : memref<4x1x1xf32, #tpu.memory_space<vmem>>, vector<4x1x1xf32>
    %c0_20 = arith.constant 0 : index
    %c2_21 = arith.constant 2 : index
    %c0_22 = arith.constant 0 : index
    %64 = vector.load %arg8[%c0_20, %c2_21, %c0_22] : memref<4x16x20xf32, #tpu.memory_space<vmem>>, vector<4x12x20xf32>
    %cst_23 = arith.constant 0.000000e+00 : f32
    %65 = vector.broadcast %cst_23 : f32 to vector<4x8x16xf32>
    %66 = vector.extract_strided_slice %64 {offsets = [0, 0, 0], sizes = [4, 12, 16], strides = [1, 1, 1]} : vector<4x12x20xf32> to vector<4x12x16xf32>
    %67 = vector.extract_strided_slice %66 {offsets = [0, 0, 0], sizes = [4, 8, 16], strides = [1, 1, 1]} : vector<4x12x16xf32> to vector<4x8x16xf32>
    %68 = vector.extract_strided_slice %62 {offsets = [0, 0, 0], sizes = [4, 1, 1], strides = [1, 1, 1]} : vector<4x1x25xf32> to vector<4x1x1xf32>
    %69 = vector.broadcast %68 : vector<4x1x1xf32> to vector<4x8x16xf32>
    %70 = arith.mulf %67, %69 : vector<4x8x16xf32>
    %71 = arith.addf %65, %70 : vector<4x8x16xf32>
    %72 = vector.extract_strided_slice %66 {offsets = [0, 1, 0], sizes = [4, 8, 16], strides = [1, 1, 1]} : vector<4x12x16xf32> to vector<4x8x16xf32>
    %73 = vector.extract_strided_slice %62 {offsets = [0, 0, 5], sizes = [4, 1, 1], strides = [1, 1, 1]} : vector<4x1x25xf32> to vector<4x1x1xf32>
    %74 = vector.broadcast %73 : vector<4x1x1xf32> to vector<4x8x16xf32>
    %75 = arith.mulf %72, %74 : vector<4x8x16xf32>
    %76 = arith.addf %71, %75 : vector<4x8x16xf32>
    %77 = vector.extract_strided_slice %66 {offsets = [0, 2, 0], sizes = [4, 8, 16], strides = [1, 1, 1]} : vector<4x12x16xf32> to vector<4x8x16xf32>
    %78 = vector.extract_strided_slice %62 {offsets = [0, 0, 10], sizes = [4, 1, 1], strides = [1, 1, 1]} : vector<4x1x25xf32> to vector<4x1x1xf32>
    %79 = vector.broadcast %78 : vector<4x1x1xf32> to vector<4x8x16xf32>
    %80 = arith.mulf %77, %79 : vector<4x8x16xf32>
    %81 = arith.addf %76, %80 : vector<4x8x16xf32>
    %82 = vector.extract_strided_slice %66 {offsets = [0, 3, 0], sizes = [4, 8, 16], strides = [1, 1, 1]} : vector<4x12x16xf32> to vector<4x8x16xf32>
    %83 = vector.extract_strided_slice %62 {offsets = [0, 0, 15], sizes = [4, 1, 1], strides = [1, 1, 1]} : vector<4x1x25xf32> to vector<4x1x1xf32>
    %84 = vector.broadcast %83 : vector<4x1x1xf32> to vector<4x8x16xf32>
    %85 = arith.mulf %82, %84 : vector<4x8x16xf32>
    %86 = arith.addf %81, %85 : vector<4x8x16xf32>
    %87 = vector.extract_strided_slice %66 {offsets = [0, 4, 0], sizes = [4, 8, 16], strides = [1, 1, 1]} : vector<4x12x16xf32> to vector<4x8x16xf32>
    %88 = vector.extract_strided_slice %62 {offsets = [0, 0, 20], sizes = [4, 1, 1], strides = [1, 1, 1]} : vector<4x1x25xf32> to vector<4x1x1xf32>
    %89 = vector.broadcast %88 : vector<4x1x1xf32> to vector<4x8x16xf32>
    %90 = arith.mulf %87, %89 : vector<4x8x16xf32>
    %91 = arith.addf %86, %90 : vector<4x8x16xf32>
    %92 = vector.extract_strided_slice %64 {offsets = [0, 0, 1], sizes = [4, 12, 16], strides = [1, 1, 1]} : vector<4x12x20xf32> to vector<4x12x16xf32>
    %93 = vector.extract_strided_slice %92 {offsets = [0, 0, 0], sizes = [4, 8, 16], strides = [1, 1, 1]} : vector<4x12x16xf32> to vector<4x8x16xf32>
    %94 = vector.extract_strided_slice %62 {offsets = [0, 0, 1], sizes = [4, 1, 1], strides = [1, 1, 1]} : vector<4x1x25xf32> to vector<4x1x1xf32>
    %95 = vector.broadcast %94 : vector<4x1x1xf32> to vector<4x8x16xf32>
    %96 = arith.mulf %93, %95 : vector<4x8x16xf32>
    %97 = arith.addf %91, %96 : vector<4x8x16xf32>
    %98 = vector.extract_strided_slice %92 {offsets = [0, 1, 0], sizes = [4, 8, 16], strides = [1, 1, 1]} : vector<4x12x16xf32> to vector<4x8x16xf32>
    %99 = vector.extract_strided_slice %62 {offsets = [0, 0, 6], sizes = [4, 1, 1], strides = [1, 1, 1]} : vector<4x1x25xf32> to vector<4x1x1xf32>
    %100 = vector.broadcast %99 : vector<4x1x1xf32> to vector<4x8x16xf32>
    %101 = arith.mulf %98, %100 : vector<4x8x16xf32>
    %102 = arith.addf %97, %101 : vector<4x8x16xf32>
    %103 = vector.extract_strided_slice %92 {offsets = [0, 2, 0], sizes = [4, 8, 16], strides = [1, 1, 1]} : vector<4x12x16xf32> to vector<4x8x16xf32>
    %104 = vector.extract_strided_slice %62 {offsets = [0, 0, 11], sizes = [4, 1, 1], strides = [1, 1, 1]} : vector<4x1x25xf32> to vector<4x1x1xf32>
    %105 = vector.broadcast %104 : vector<4x1x1xf32> to vector<4x8x16xf32>
    %106 = arith.mulf %103, %105 : vector<4x8x16xf32>
    %107 = arith.addf %102, %106 : vector<4x8x16xf32>
    %108 = vector.extract_strided_slice %92 {offsets = [0, 3, 0], sizes = [4, 8, 16], strides = [1, 1, 1]} : vector<4x12x16xf32> to vector<4x8x16xf32>
    %109 = vector.extract_strided_slice %62 {offsets = [0, 0, 16], sizes = [4, 1, 1], strides = [1, 1, 1]} : vector<4x1x25xf32> to vector<4x1x1xf32>
    %110 = vector.broadcast %109 : vector<4x1x1xf32> to vector<4x8x16xf32>
    %111 = arith.mulf %108, %110 : vector<4x8x16xf32>
    %112 = arith.addf %107, %111 : vector<4x8x16xf32>
    %113 = vector.extract_strided_slice %92 {offsets = [0, 4, 0], sizes = [4, 8, 16], strides = [1, 1, 1]} : vector<4x12x16xf32> to vector<4x8x16xf32>
    %114 = vector.extract_strided_slice %62 {offsets = [0, 0, 21], sizes = [4, 1, 1], strides = [1, 1, 1]} : vector<4x1x25xf32> to vector<4x1x1xf32>
    %115 = vector.broadcast %114 : vector<4x1x1xf32> to vector<4x8x16xf32>
    %116 = arith.mulf %113, %115 : vector<4x8x16xf32>
    %117 = arith.addf %112, %116 : vector<4x8x16xf32>
    %118 = vector.extract_strided_slice %64 {offsets = [0, 0, 2], sizes = [4, 12, 16], strides = [1, 1, 1]} : vector<4x12x20xf32> to vector<4x12x16xf32>
    %119 = vector.extract_strided_slice %118 {offsets = [0, 0, 0], sizes = [4, 8, 16], strides = [1, 1, 1]} : vector<4x12x16xf32> to vector<4x8x16xf32>
    %120 = vector.extract_strided_slice %62 {offsets = [0, 0, 2], sizes = [4, 1, 1], strides = [1, 1, 1]} : vector<4x1x25xf32> to vector<4x1x1xf32>
    %121 = vector.broadcast %120 : vector<4x1x1xf32> to vector<4x8x16xf32>
    %122 = arith.mulf %119, %121 : vector<4x8x16xf32>
    %123 = arith.addf %117, %122 : vector<4x8x16xf32>
    %124 = vector.extract_strided_slice %118 {offsets = [0, 1, 0], sizes = [4, 8, 16], strides = [1, 1, 1]} : vector<4x12x16xf32> to vector<4x8x16xf32>
    %125 = vector.extract_strided_slice %62 {offsets = [0, 0, 7], sizes = [4, 1, 1], strides = [1, 1, 1]} : vector<4x1x25xf32> to vector<4x1x1xf32>
    %126 = vector.broadcast %125 : vector<4x1x1xf32> to vector<4x8x16xf32>
    %127 = arith.mulf %124, %126 : vector<4x8x16xf32>
    %128 = arith.addf %123, %127 : vector<4x8x16xf32>
    %129 = vector.extract_strided_slice %118 {offsets = [0, 2, 0], sizes = [4, 8, 16], strides = [1, 1, 1]} : vector<4x12x16xf32> to vector<4x8x16xf32>
    %130 = vector.extract_strided_slice %62 {offsets = [0, 0, 12], sizes = [4, 1, 1], strides = [1, 1, 1]} : vector<4x1x25xf32> to vector<4x1x1xf32>
    %131 = vector.broadcast %130 : vector<4x1x1xf32> to vector<4x8x16xf32>
    %132 = arith.mulf %129, %131 : vector<4x8x16xf32>
    %133 = arith.addf %128, %132 : vector<4x8x16xf32>
    %134 = vector.extract_strided_slice %118 {offsets = [0, 3, 0], sizes = [4, 8, 16], strides = [1, 1, 1]} : vector<4x12x16xf32> to vector<4x8x16xf32>
    %135 = vector.extract_strided_slice %62 {offsets = [0, 0, 17], sizes = [4, 1, 1], strides = [1, 1, 1]} : vector<4x1x25xf32> to vector<4x1x1xf32>
    %136 = vector.broadcast %135 : vector<4x1x1xf32> to vector<4x8x16xf32>
    %137 = arith.mulf %134, %136 : vector<4x8x16xf32>
    %138 = arith.addf %133, %137 : vector<4x8x16xf32>
    %139 = vector.extract_strided_slice %118 {offsets = [0, 4, 0], sizes = [4, 8, 16], strides = [1, 1, 1]} : vector<4x12x16xf32> to vector<4x8x16xf32>
    %140 = vector.extract_strided_slice %62 {offsets = [0, 0, 22], sizes = [4, 1, 1], strides = [1, 1, 1]} : vector<4x1x25xf32> to vector<4x1x1xf32>
    %141 = vector.broadcast %140 : vector<4x1x1xf32> to vector<4x8x16xf32>
    %142 = arith.mulf %139, %141 : vector<4x8x16xf32>
    %143 = arith.addf %138, %142 : vector<4x8x16xf32>
    %144 = vector.extract_strided_slice %64 {offsets = [0, 0, 3], sizes = [4, 12, 16], strides = [1, 1, 1]} : vector<4x12x20xf32> to vector<4x12x16xf32>
    %145 = vector.extract_strided_slice %144 {offsets = [0, 0, 0], sizes = [4, 8, 16], strides = [1, 1, 1]} : vector<4x12x16xf32> to vector<4x8x16xf32>
    %146 = vector.extract_strided_slice %62 {offsets = [0, 0, 3], sizes = [4, 1, 1], strides = [1, 1, 1]} : vector<4x1x25xf32> to vector<4x1x1xf32>
    %147 = vector.broadcast %146 : vector<4x1x1xf32> to vector<4x8x16xf32>
    %148 = arith.mulf %145, %147 : vector<4x8x16xf32>
    %149 = arith.addf %143, %148 : vector<4x8x16xf32>
    %150 = vector.extract_strided_slice %144 {offsets = [0, 1, 0], sizes = [4, 8, 16], strides = [1, 1, 1]} : vector<4x12x16xf32> to vector<4x8x16xf32>
    %151 = vector.extract_strided_slice %62 {offsets = [0, 0, 8], sizes = [4, 1, 1], strides = [1, 1, 1]} : vector<4x1x25xf32> to vector<4x1x1xf32>
    %152 = vector.broadcast %151 : vector<4x1x1xf32> to vector<4x8x16xf32>
    %153 = arith.mulf %150, %152 : vector<4x8x16xf32>
    %154 = arith.addf %149, %153 : vector<4x8x16xf32>
    %155 = vector.extract_strided_slice %144 {offsets = [0, 2, 0], sizes = [4, 8, 16], strides = [1, 1, 1]} : vector<4x12x16xf32> to vector<4x8x16xf32>
    %156 = vector.extract_strided_slice %62 {offsets = [0, 0, 13], sizes = [4, 1, 1], strides = [1, 1, 1]} : vector<4x1x25xf32> to vector<4x1x1xf32>
    %157 = vector.broadcast %156 : vector<4x1x1xf32> to vector<4x8x16xf32>
    %158 = arith.mulf %155, %157 : vector<4x8x16xf32>
    %159 = arith.addf %154, %158 : vector<4x8x16xf32>
    %160 = vector.extract_strided_slice %144 {offsets = [0, 3, 0], sizes = [4, 8, 16], strides = [1, 1, 1]} : vector<4x12x16xf32> to vector<4x8x16xf32>
    %161 = vector.extract_strided_slice %62 {offsets = [0, 0, 18], sizes = [4, 1, 1], strides = [1, 1, 1]} : vector<4x1x25xf32> to vector<4x1x1xf32>
    %162 = vector.broadcast %161 : vector<4x1x1xf32> to vector<4x8x16xf32>
    %163 = arith.mulf %160, %162 : vector<4x8x16xf32>
    %164 = arith.addf %159, %163 : vector<4x8x16xf32>
    %165 = vector.extract_strided_slice %144 {offsets = [0, 4, 0], sizes = [4, 8, 16], strides = [1, 1, 1]} : vector<4x12x16xf32> to vector<4x8x16xf32>
    %166 = vector.extract_strided_slice %62 {offsets = [0, 0, 23], sizes = [4, 1, 1], strides = [1, 1, 1]} : vector<4x1x25xf32> to vector<4x1x1xf32>
    %167 = vector.broadcast %166 : vector<4x1x1xf32> to vector<4x8x16xf32>
    %168 = arith.mulf %165, %167 : vector<4x8x16xf32>
    %169 = arith.addf %164, %168 : vector<4x8x16xf32>
    %170 = vector.extract_strided_slice %64 {offsets = [0, 0, 4], sizes = [4, 12, 16], strides = [1, 1, 1]} : vector<4x12x20xf32> to vector<4x12x16xf32>
    %171 = vector.extract_strided_slice %170 {offsets = [0, 0, 0], sizes = [4, 8, 16], strides = [1, 1, 1]} : vector<4x12x16xf32> to vector<4x8x16xf32>
    %172 = vector.extract_strided_slice %62 {offsets = [0, 0, 4], sizes = [4, 1, 1], strides = [1, 1, 1]} : vector<4x1x25xf32> to vector<4x1x1xf32>
    %173 = vector.broadcast %172 : vector<4x1x1xf32> to vector<4x8x16xf32>
    %174 = arith.mulf %171, %173 : vector<4x8x16xf32>
    %175 = arith.addf %169, %174 : vector<4x8x16xf32>
    %176 = vector.extract_strided_slice %170 {offsets = [0, 1, 0], sizes = [4, 8, 16], strides = [1, 1, 1]} : vector<4x12x16xf32> to vector<4x8x16xf32>
    %177 = vector.extract_strided_slice %62 {offsets = [0, 0, 9], sizes = [4, 1, 1], strides = [1, 1, 1]} : vector<4x1x25xf32> to vector<4x1x1xf32>
    %178 = vector.broadcast %177 : vector<4x1x1xf32> to vector<4x8x16xf32>
    %179 = arith.mulf %176, %178 : vector<4x8x16xf32>
    %180 = arith.addf %175, %179 : vector<4x8x16xf32>
    %181 = vector.extract_strided_slice %170 {offsets = [0, 2, 0], sizes = [4, 8, 16], strides = [1, 1, 1]} : vector<4x12x16xf32> to vector<4x8x16xf32>
    %182 = vector.extract_strided_slice %62 {offsets = [0, 0, 14], sizes = [4, 1, 1], strides = [1, 1, 1]} : vector<4x1x25xf32> to vector<4x1x1xf32>
    %183 = vector.broadcast %182 : vector<4x1x1xf32> to vector<4x8x16xf32>
    %184 = arith.mulf %181, %183 : vector<4x8x16xf32>
    %185 = arith.addf %180, %184 : vector<4x8x16xf32>
    %186 = vector.extract_strided_slice %170 {offsets = [0, 3, 0], sizes = [4, 8, 16], strides = [1, 1, 1]} : vector<4x12x16xf32> to vector<4x8x16xf32>
    %187 = vector.extract_strided_slice %62 {offsets = [0, 0, 19], sizes = [4, 1, 1], strides = [1, 1, 1]} : vector<4x1x25xf32> to vector<4x1x1xf32>
    %188 = vector.broadcast %187 : vector<4x1x1xf32> to vector<4x8x16xf32>
    %189 = arith.mulf %186, %188 : vector<4x8x16xf32>
    %190 = arith.addf %185, %189 : vector<4x8x16xf32>
    %191 = vector.extract_strided_slice %170 {offsets = [0, 4, 0], sizes = [4, 8, 16], strides = [1, 1, 1]} : vector<4x12x16xf32> to vector<4x8x16xf32>
    %192 = vector.extract_strided_slice %62 {offsets = [0, 0, 24], sizes = [4, 1, 1], strides = [1, 1, 1]} : vector<4x1x25xf32> to vector<4x1x1xf32>
    %193 = vector.broadcast %192 : vector<4x1x1xf32> to vector<4x8x16xf32>
    %194 = arith.mulf %191, %193 : vector<4x8x16xf32>
    %195 = arith.addf %190, %194 : vector<4x8x16xf32>
    %196 = vector.broadcast %63 : vector<4x1x1xf32> to vector<4x8x16xf32>
    %197 = arith.addf %195, %196 : vector<4x8x16xf32>
    %198 = arith.negf %197 : vector<4x8x16xf32>
    %199 = math.exp %198 : vector<4x8x16xf32>
    %cst_24 = arith.constant 1.000000e+00 : f32
    %200 = vector.broadcast %cst_24 : f32 to vector<4x8x16xf32>
    %201 = arith.addf %200, %199 : vector<4x8x16xf32>
    %202 = arith.divf %200, %201 : vector<4x8x16xf32>
    %203 = arith.mulf %197, %202 : vector<4x8x16xf32>
    %c0_25 = arith.constant 0 : index
    %c4 = arith.constant 4 : index
    %c2_26 = arith.constant 2 : index
    %204 = vector.load %arg8[%c0_25, %c4, %c2_26] : memref<4x16x20xf32, #tpu.memory_space<vmem>>, vector<4x8x16xf32>
    %205 = vector.shape_cast %204 : vector<4x8x16xf32> to vector<4x128xf32>
    %c0_27 = arith.constant 0 : index
    %c0_28 = arith.constant 0 : index
    %c0_29 = arith.constant 0 : index
    %206 = vector.load %arg7[%c0_27, %c0_28, %c0_29] : memref<1x8x128xf32, #tpu.memory_space<vmem>>, vector<1x4x128xf32>
    %207 = vector.shape_cast %206 : vector<1x4x128xf32> to vector<4x128xf32>
    %208 = vector.shape_cast %205 : vector<4x128xf32> to vector<1x4x128xf32>
    tpu.vector_store %arg7[%c0_27, %c0_28, %c0_29], %208 {strides = array<i32>} : memref<1x8x128xf32, #tpu.memory_space<vmem>>, vector<1x4x128xf32>,
    %209 = vector.shape_cast %203 : vector<4x8x16xf32> to vector<4x128xf32>
    %c0_30 = arith.constant 0 : index
    %c4_31 = arith.constant 4 : index
    %c0_32 = arith.constant 0 : index
    %210 = vector.load %arg7[%c0_30, %c4_31, %c0_32] : memref<1x8x128xf32, #tpu.memory_space<vmem>>, vector<1x4x128xf32>
    %211 = vector.shape_cast %210 : vector<1x4x128xf32> to vector<4x128xf32>
    %212 = vector.shape_cast %209 : vector<4x128xf32> to vector<1x4x128xf32>
    tpu.vector_store %arg7[%c0_30, %c4_31, %c0_32], %212 {strides = array<i32>} : memref<1x8x128xf32, #tpu.memory_space<vmem>>, vector<1x4x128xf32>,
    return
  }
  func.func @transform_0(%arg0: i32, %arg1: i32) -> (i32, i32, i32, i32) {
    %c0_i32 = arith.constant 0 : i32
    %c0_i32_0 = arith.constant 0 : i32
    %c0_i32_1 = arith.constant 0 : i32
    %c0_i32_2 = arith.constant 0 : i32
    return %arg0, %c0_i32, %c0_i32_0, %c0_i32_1 : i32, i32, i32, i32
  }
  func.func @transform_1(%arg0: i32, %arg1: i32) -> (i32, i32, i32) {
    %c0_i32 = arith.constant 0 : i32
    %c0_i32_0 = arith.constant 0 : i32
    %c0_i32_1 = arith.constant 0 : i32
    %c0_i32_2 = arith.constant 0 : i32
    return %c0_i32, %c0_i32_0, %c0_i32_1 : i32, i32, i32
  }
  func.func @transform_2(%arg0: i32, %arg1: i32) -> (i32, i32, i32) {
    %c0_i32 = arith.constant 0 : i32
    %c0_i32_0 = arith.constant 0 : i32
    %c0_i32_1 = arith.constant 0 : i32
    %c0_i32_2 = arith.constant 0 : i32
    return %c0_i32, %c0_i32_0, %c0_i32_1 : i32, i32, i32
  }
  func.func @transform_3(%arg0: i32, %arg1: i32) -> (i32, i32, i32) {
    %c0_i32 = arith.constant 0 : i32
    %c0_i32_0 = arith.constant 0 : i32
    %c0_i32_1 = arith.constant 0 : i32
    %c0_i32_2 = arith.constant 0 : i32
    return %c0_i32, %c0_i32_0, %c0_i32_1 : i32, i32, i32
  }
  func.func @transform_4(%arg0: i32, %arg1: i32) -> (i32, i32, i32) {
    %c0_i32 = arith.constant 0 : i32
    %c0_i32_0 = arith.constant 0 : i32
    %c0_i32_1 = arith.constant 0 : i32
    %c0_i32_2 = arith.constant 0 : i32
    return %c0_i32, %c0_i32_0, %c0_i32_1 : i32, i32, i32
  }
  func.func @transform_5(%arg0: i32, %arg1: i32) -> (i32, i32, i32) {
    %c0_i32 = arith.constant 0 : i32
    %c0_i32_0 = arith.constant 0 : i32
    return %arg0, %c0_i32, %arg1 : i32, i32, i32
  }
}

</mosaic_0001>

<llo_original>
// kernel: ghost_conv.1
$region0: #{ghost_conv.1}
  #allocation0 [shape = 'u32[]', space=smem, size = 0x4, offset = 0x4, fixed_abs, tag = 'smem constant byte address 0x4 - core index']
  #allocation1 [shape = 'u32[144,128]{1,0:T(1,128)}', space=vmem, size = 0x12000, scoped, tag = 'internal scratch']
  #allocation2 [shape = 'f32[4,16,20]{2,1,0:T(8,128)}', space=vmem, size = 0x8000, scoped, tag = 'scratch operand']
  %s0 = inlined_call_operand.vmem [shape: f32[2,4,16,16], index: 0, kind: input, shape index: {}]
  %s1 = inlined_call_operand.vmem [shape: f32[4,1,4], index: 1, kind: input, shape index: {}]
  %s2 = inlined_call_operand.vmem [shape: f32[4,1,1], index: 2, kind: input, shape index: {}]
  %s3 = inlined_call_operand.vmem [shape: f32[4,1,25], index: 3, kind: input, shape index: {}]
  %s4 = inlined_call_operand.vmem [shape: f32[4,1,1], index: 4, kind: input, shape index: {}]
  %s5 = inlined_call_operand.vmem [shape: f32[2,8,256], index: 5, kind: output, shape index: {}]
  %s6 = sld [smem:[#allocation0]]
  $region61: #{ghost_conv.1} parent=0
    _
  %s8 = ssub.s32 1, %s6
  %s9 = scalar_select 0, %s8, %s6
  loop: start=0, step=1, limit=6
  $region2: #{ghost_conv.1} parent=0 // loop_pre_header
    _
  $region3: #{ghost_conv.1} parent=0 // loop_header
    %s11 = sphi 0, %s15
    %p12 = scmp.ge.s32.totalorder %s11, 6
    %s18 = sphi 0, %s30
    %s19 = sphi 0, %s26
    %s20 = sphi 0, %s18
    %s21 = sphi 0, %s19
    %s22 = sphi 0, %s20
    %s23 = sphi 0, %s21
    %s33 = sphi 0, %s35
    %s36 = sphi 0, %s33
    %s37 = sphi 0, %s36
    %s53 = sphi 0, %s37
    %s57 = sphi 0, %s57
    %s59 = sphi 0, %s57
    %s60 = sphi 0, %s59
    %s74 = sphi 0, %s60
    %s78 = sphi 0, %s78
    %s80 = sphi 0, %s78
    %s81 = sphi 0, %s80
    %s95 = sphi 0, %s81
    %s99 = sphi 0, %s99
    %s101 = sphi 0, %s99
    %s102 = sphi 0, %s101
    %s116 = sphi 0, %s102
    %s120 = sphi 0, %s120
    %s122 = sphi 0, %s120
    %s123 = sphi 0, %s122
    %s137 = sphi 0, %s123
    %s145 = sphi 0, %s147
    %s148 = sphi 0, %s145
    %s149 = sphi 0, %s148
    %s165 = sphi 0, %s149
  $region4: #{ghost_conv.1} parent=0 // loop_header_branch
    %14 = sbr.rel (%p12) target = $region8
  $region5: #{ghost_conv.1} parent=0 // loop_body
    %s16 = ssub.s32 %s11, 1
    %s17 = ssub.s32 %s11, 2
    %s24 = sadd.s32 1, %s19
    %p25 = scmp.ge.s32.totalorder %s24, 2
    %s26 = scalar_select %p25, 0, %s24
    %s27 = sadd.s32 1, %s18
    %s28 = scalar_select %p25, %s27, %s18
    %p29 = scmp.ge.s32.totalorder %s28, 2
    %s30 = scalar_select %p29, 0, %s28
    %s31 = ssub.s32 %s18, %s30
    %p32 = scmp.eq.s32.totalorder %s31, 0
    %s34 = sadd.s32 %s33, 1
    %s35 = scalar_select %p32, %s33, %s34
    %p38 = pneg %p32
    %p39 = scmp.eq.s32.totalorder %s11, 3
    %p40 = por %p38, %p39
    %p41 = scmp.ne.s32.totalorder %s33, %s36
    %p42 = scmp.eq.s32.totalorder %s11, 0
    %p43 = por %p41, %p42
    %p44 = scmp.ne.s32.totalorder %s33, %s36
    %p45 = scmp.eq.s32.totalorder %s16, 3
    %p46 = por %p44, %p45
    %p47 = scmp.ne.s32.totalorder %s36, %s37
    %p48 = scmp.eq.s32.totalorder %s16, 0
    %p49 = por %p47, %p48
    %p50 = scmp.ne.s32.totalorder %s36, %s37
    %p51 = scmp.eq.s32.totalorder %s17, 3
    %p52 = por %p50, %p51
    %p54 = scmp.ne.s32.totalorder %s37, %s53
    %p55 = scmp.eq.s32.totalorder %s17, 0
    %p56 = por %p54, %p55
    %s58 = sadd.s32 %s57, 1
    %p61 = scmp.eq.s32.totalorder %s11, 3
    %p62 = scmp.ne.s32.totalorder %s57, %s59
    %p63 = scmp.eq.s32.totalorder %s11, 0
    %p64 = por %p62, %p63
    %p65 = scmp.ne.s32.totalorder %s57, %s59
    %p66 = scmp.eq.s32.totalorder %s16, 3
    %p67 = por %p65, %p66
    %p68 = scmp.ne.s32.totalorder %s59, %s60
    %p69 = scmp.eq.s32.totalorder %s16, 0
    %p70 = por %p68, %p69
    %p71 = scmp.ne.s32.totalorder %s59, %s60
    %p72 = scmp.eq.s32.totalorder %s17, 3
    %p73 = por %p71, %p72
    %p75 = scmp.ne.s32.totalorder %s60, %s74
    %p76 = scmp.eq.s32.totalorder %s17, 0
    %p77 = por %p75, %p76
    %s79 = sadd.s32 %s78, 1
    %p82 = scmp.eq.s32.totalorder %s11, 3
    %p83 = scmp.ne.s32.totalorder %s78, %s80
    %p84 = scmp.eq.s32.totalorder %s11, 0
    %p85 = por %p83, %p84
    %p86 = scmp.ne.s32.totalorder %s78, %s80
    %p87 = scmp.eq.s32.totalorder %s16, 3
    %p88 = por %p86, %p87
    %p89 = scmp.ne.s32.totalorder %s80, %s81
    %p90 = scmp.eq.s32.totalorder %s16, 0
    %p91 = por %p89, %p90
    %p92 = scmp.ne.s32.totalorder %s80, %s81
    %p93 = scmp.eq.s32.totalorder %s17, 3
    %p94 = por %p92, %p93
    %p96 = scmp.ne.s32.totalorder %s81, %s95
    %p97 = scmp.eq.s32.totalorder %s17, 0
    %p98 = por %p96, %p97
    %s100 = sadd.s32 %s99, 1
    %p103 = scmp.eq.s32.totalorder %s11, 3
    %p104 = scmp.ne.s32.totalorder %s99, %s101
    %p105 = scmp.eq.s32.totalorder %s11, 0
    %p106 = por %p104, %p105
    %p107 = scmp.ne.s32.totalorder %s99, %s101
    %p108 = scmp.eq.s32.totalorder %s16, 3
    %p109 = por %p107, %p108
    %p110 = scmp.ne.s32.totalorder %s101, %s102
    %p111 = scmp.eq.s32.totalorder %s16, 0
    %p112 = por %p110, %p111
    %p113 = scmp.ne.s32.totalorder %s101, %s102
    %p114 = scmp.eq.s32.totalorder %s17, 3
    %p115 = por %p113, %p114
    %p117 = scmp.ne.s32.totalorder %s102, %s116
    %p118 = scmp.eq.s32.totalorder %s17, 0
    %p119 = por %p117, %p118
    %s121 = sadd.s32 %s120, 1
    %p124 = scmp.eq.s32.totalorder %s11, 3
    %p125 = scmp.ne.s32.totalorder %s120, %s122
    %p126 = scmp.eq.s32.totalorder %s11, 0
    %p127 = por %p125, %p126
    %p128 = scmp.ne.s32.totalorder %s120, %s122
    %p129 = scmp.eq.s32.totalorder %s16, 3
    %p130 = por %p128, %p129
    %p131 = scmp.ne.s32.totalorder %s122, %s123
    %p132 = scmp.eq.s32.totalorder %s16, 0
    %p133 = por %p131, %p132
    %p134 = scmp.ne.s32.totalorder %s122, %s123
    %p135 = scmp.eq.s32.totalorder %s17, 3
    %p136 = por %p134, %p135
    %p138 = scmp.ne.s32.totalorder %s123, %s137
    %p139 = scmp.eq.s32.totalorder %s17, 0
    %p140 = por %p138, %p139
    %s141 = ssub.s32 %s18, %s30
    %s142 = ssub.s32 %s19, %s26
    %s143 = sor.u32 %s141, %s142
    %p144 = scmp.eq.s32.totalorder %s143, 0
    %s146 = sadd.s32 %s145, 1
    %s147 = scalar_select %p144, %s145, %s146
    %p150 = pneg %p144
    %p151 = scmp.eq.s32.totalorder %s11, 3
    %p152 = por %p150, %p151
    %p153 = scmp.ne.s32.totalorder %s145, %s148
    %p154 = scmp.eq.s32.totalorder %s11, 0
    %p155 = por %p153, %p154
    %p156 = scmp.ne.s32.totalorder %s145, %s148
    %p157 = scmp.eq.s32.totalorder %s16, 3
    %p158 = por %p156, %p157
    %p159 = scmp.ne.s32.totalorder %s148, %s149
    %p160 = scmp.eq.s32.totalorder %s16, 0
    %p161 = por %p159, %p160
    %p162 = scmp.ne.s32.totalorder %s148, %s149
    %p163 = scmp.eq.s32.totalorder %s17, 3
    %p164 = por %p162, %p163
    %p166 = scmp.ne.s32.totalorder %s149, %s165
    %p167 = scmp.eq.s32.totalorder %s17, 0
    %p168 = por %p166, %p167
    %p169 = scmp.le.s32.totalorder 1, %s11
    %p170 = scmp.lt.s32.totalorder %s11, 5
    %p171 = pnand %p169, %p170
    %p172 = pneg %p171
    // Predicated region
    $region9: #{ghost_conv.1} parent=5 // pred_check
      _
    $region10: #{ghost_conv.1} parent=5 // pred_check_branch
      %174 = sbr.rel (%p171) target = $region12
    $region11: #{ghost_conv.1} parent=5 // pred_region
      %s175 = ssub.s32 %s11, 1
      // Predicated region
      $region13: #{ghost_conv.1} parent=11 // pred_check
        %p176 = pneg %p70
      $region14: #{ghost_conv.1} parent=11 // pred_check_branch
        %178 = sbr.rel (%p176) target = $region16
      $region15: #{ghost_conv.1} parent=11 // pred_region
        _
      $region16: #{ghost_conv.1} parent=11 // pred_fallthru
        _
      // Predicated region
      $region17: #{ghost_conv.1} parent=11 // pred_check
        %p179 = pneg %p91
      $region18: #{ghost_conv.1} parent=11 // pred_check_branch
        %181 = sbr.rel (%p179) target = $region20
      $region19: #{ghost_conv.1} parent=11 // pred_region
        _
      $region20: #{ghost_conv.1} parent=11 // pred_fallthru
        _
      // Predicated region
      $region21: #{ghost_conv.1} parent=11 // pred_check
        %p182 = pneg %p112
      $region22: #{ghost_conv.1} parent=11 // pred_check_branch
        %184 = sbr.rel (%p182) target = $region24
      $region23: #{ghost_conv.1} parent=11 // pred_region
        _
      $region24: #{ghost_conv.1} parent=11 // pred_fallthru
        _
      // Predicated region
      $region25: #{ghost_conv.1} parent=11 // pred_check
        %p185 = pneg %p133
      $region26: #{ghost_conv.1} parent=11 // pred_check_branch
        %187 = sbr.rel (%p185) target = $region28
      $region27: #{ghost_conv.1} parent=11 // pred_region
        _
      $region28: #{ghost_conv.1} parent=11 // pred_fallthru
        _
    $region12: #{ghost_conv.1} parent=5 // pred_fallthru
      _
    %p188 = scmp.lt.s32.totalorder %s11, 4
    // Predicated region
    $region29: #{ghost_conv.1} parent=5 // pred_check
      %p189 = pneg %p188
    $region30: #{ghost_conv.1} parent=5 // pred_check_branch
      %191 = sbr.rel (%p189) target = $region32
    $region31: #{ghost_conv.1} parent=5 // pred_region
      // Predicated region
      $region33: #{ghost_conv.1} parent=31 // pred_check
        %p192 = pneg %p43
      $region34: #{ghost_conv.1} parent=31 // pred_check_branch
        %194 = sbr.rel (%p192) target = $region36
      $region35: #{ghost_conv.1} parent=31 // pred_region
        %p195 = scmp.lt.s32.totalorder %s18, 1
        %s196 = scalar_select %p195, %s18, 1
        %s197 = smul.addr %s196, 8
        %s198 = smul.addr %s197, 8
        %s199 = scalar_lea.vmem %s0, %s198
      $region36: #{ghost_conv.1} parent=31 // pred_fallthru
        _
    $region32: #{ghost_conv.1} parent=5 // pred_fallthru
      _
    %p200 = scmp.le.s32.totalorder 1, %s11
    %p201 = scmp.lt.s32.totalorder %s11, 5
    %p202 = pnand %p200, %p201
    %p203 = pneg %p202
    // Predicated region
    $region37: #{ghost_conv.1} parent=5 // pred_check
      _
    $region38: #{ghost_conv.1} parent=5 // pred_check_branch
      %205 = sbr.rel (%p202) target = $region40
    $region39: #{ghost_conv.1} parent=5 // pred_region
      %s206 = ssub.s32 %s11, 1
      %p207 = scmp.lt.s32.totalorder %s20, 1
      %s208 = scalar_select %p207, %s20, 1
      %s209 = smul.addr %s208, 8
      %s210 = smul.addr %s209, 8
      %s211 = scalar_lea.vmem %s0, %s210
      %p212 = pneg %p49
      %p213 = pneg %p46
      %p214 = pneg %p70
      %p215 = pneg %p67
      %p216 = pneg %p91
      %p217 = pneg %p88
      %p218 = pneg %p112
      %p219 = pneg %p109
      %p220 = pneg %p133
      %p221 = pneg %p130
      %p222 = pneg %p161
      %p223 = pneg %p158
      %p224 = scmp.lt.s32.totalorder %s20, 1
      %s225 = scalar_select %p224, %s20, 1
      %p226 = scmp.lt.s32.totalorder %s21, 1
      %s227 = scalar_select %p226, %s21, 1
      %s228 = smul.addr %s225, 2
      %s229 = sadd.s32 %s227, %s228
      %s230 = smul.addr %s229, 8
      %s231 = scalar_lea.vmem %s5, %s230
      %p232 = scmp.lt.s32.totalorder %s20, 1
      %s233 = scalar_select %p232, %s20, 1
      %s234 = smul.addr %s233, 8
      %s235 = smul.addr %s234, 8
      %s236 = scalar_lea.vmem %s0, %s235
      %p237 = scmp.lt.s32.totalorder %s20, 1
      %s238 = scalar_select %p237, %s20, 1
      %p239 = scmp.lt.s32.totalorder %s21, 1
      %s240 = scalar_select %p239, %s21, 1
      %s241 = smul.addr %s238, 2
      %s242 = sadd.s32 %s240, %s241
      %s243 = smul.addr %s242, 8
      %s244 = scalar_lea.vmem %s5, %s243
      %s245 = smul.u32 %s21, 8
      %p246 = scmp.eq.s32.totalorder %s21, 0
      // Predicated region
      $region41: #{ghost_conv.1} parent=39 // pred_check
        %p247 = pneg %p246
      $region42: #{ghost_conv.1} parent=39 // pred_check_branch
        %249 = sbr.rel (%p247) target = $region44
      $region43: #{ghost_conv.1} parent=39 // pred_region
        %vm250 = vcmask 15360
        %251 = vst.msk [vmem:[#allocation2] sm:$0xff] %vm250, 0.0
        %252 = vst.msk [vmem:[#allocation2 + $0x8] sm:$0xff] %vm250, 0.0
        %253 = vst.msk [vmem:[#allocation2 + $0x10] sm:$0xff] %vm250, 0.0
        %254 = vst.msk [vmem:[#allocation2 + $0x18] sm:$0xff] %vm250, 0.0
        %255 = vst.msk [vmem:[#allocation2 + $0x20] sm:$0xff] %vm250, 0.0
        %256 = vst.msk [vmem:[#allocation2 + $0x28] sm:$0xff] %vm250, 0.0
        %257 = vst.msk [vmem:[#allocation2 + $0x30] sm:$0xff] %vm250, 0.0
        %258 = vst.msk [vmem:[#allocation2 + $0x38] sm:$0xff] %vm250, 0.0
        %vm259 = vcmask 162960
        %260 = vst.msk [vmem:[#allocation2] sm:$0xff] %vm259, 0.0
        %261 = vst.msk [vmem:[#allocation2 + $0x8] sm:$0xff] %vm259, 0.0
        %262 = vst.msk [vmem:[#allocation2 + $0x10] sm:$0xff] %vm259, 0.0
        %263 = vst.msk [vmem:[#allocation2 + $0x18] sm:$0xff] %vm259, 0.0
        %264 = vst.msk [vmem:[#allocation2 + $0x20] sm:$0xff] %vm259, 0.0
        %265 = vst.msk [vmem:[#allocation2 + $0x28] sm:$0xff] %vm259, 0.0
        %266 = vst.msk [vmem:[#allocation2 + $0x30] sm:$0xff] %vm259, 0.0
        %267 = vst.msk [vmem:[#allocation2 + $0x38] sm:$0xff] %vm259, 0.0
        %vm268 = vcmask 156672
        %269 = vst.msk [vmem:[#allocation2 + $0x2] sm:$0x3] %vm268, 0.0
        %270 = vst.msk [vmem:[#allocation2 + $0x12] sm:$0x3] %vm268, 0.0
        %271 = vst.msk [vmem:[#allocation2 + $0x22] sm:$0x3] %vm268, 0.0
        %272 = vst.msk [vmem:[#allocation2 + $0x32] sm:$0x3] %vm268, 0.0
      $region44: #{ghost_conv.1} parent=39 // pred_fallthru
        _
      %p273 = scmp.eq.s32.totalorder %s21, 1
      // Predicated region
      $region45: #{ghost_conv.1} parent=39 // pred_check
        %p274 = pneg %p273
      $region46: #{ghost_conv.1} parent=39 // pred_check_branch
        %276 = sbr.rel (%p274) target = $region48
      $region47: #{ghost_conv.1} parent=39 // pred_region
        %vm277 = vcmask 156672
        %278 = vst.msk [vmem:[#allocation2 + $0xc] sm:$0x3] %vm277, 0.0
        %279 = vst.msk [vmem:[#allocation2 + $0x1c] sm:$0x3] %vm277, 0.0
        %280 = vst.msk [vmem:[#allocation2 + $0x2c] sm:$0x3] %vm277, 0.0
        %281 = vst.msk [vmem:[#allocation2 + $0x3c] sm:$0x3] %vm277, 0.0
      $region48: #{ghost_conv.1} parent=39 // pred_fallthru
        _
      %s282 = ssub.s32 %s245, 2
      %p283 = scmp.gt.s32.totalorder %s282, 0
      %s284 = scalar_select %p283, %s282, 0
      %p285 = scmp.lt.s32.totalorder %s284, 4
      %s286 = scalar_select %p285, %s284, 4
      %s287 = scalar_lea.vmem %s236, %s286
      %v288 = vld [vmem:[%s287] sm:$0xff]
      %v289 = vld [vmem:[%s287 + $0x8] sm:$0xf]
      %v290 = vld [vmem:[%s287 + $0x10] sm:$0xff]
      %v291 = vld [vmem:[%s287 + $0x18] sm:$0xf]
      %v292 = vld [vmem:[%s287 + $0x20] sm:$0xff]
      %v293 = vld [vmem:[%s287 + $0x28] sm:$0xf]
      %v294 = vld [vmem:[%s287 + $0x30] sm:$0xff]
      %v295 = vld [vmem:[%s287 + $0x38] sm:$0xf]
      %v296 = vld [vmem:[%s2] sm:$0x1]
      %v297 = vld [vmem:[%s2 + $0x1] sm:$0x1]
      %v298 = vld [vmem:[%s2 + $0x2] sm:$0x1]
      %v299 = vld [vmem:[%s2 + $0x3] sm:$0x1]
      %v300 = vld [vmem:[%s1] sm:$0x1]
      %v301 = vld [vmem:[%s1 + $0x1] sm:$0x1]
      %v302 = vld [vmem:[%s1 + $0x2] sm:$0x1]
      %v303 = vld [vmem:[%s1 + $0x3] sm:$0x1]
      %v308 = vlaneseq
      %v309 = vshrl.u32 %v308, 7
      %v310 = vsub.s32 0, %v309
      %v311 = vrot.slane %v300, %v310
      %v312 = vlaneseq
      %v313 = vshrl.u32 %v312, 7
      %v314 = vsub.s32 0, %v313
      %v315 = vrot.slane %v301, %v314
      %v316 = vlaneseq
      %v317 = vshrl.u32 %v316, 7
      %v318 = vsub.s32 0, %v317
      %v319 = vrot.slane %v302, %v318
      %v320 = vlaneseq
      %v321 = vshrl.u32 %v320, 7
      %v322 = vsub.s32 0, %v321
      %v323 = vrot.slane %v303, %v322
      %324 = vset.pattern.permute.xlu0 0
      %325 = vperm.xlu0 %324, %v311
      %v326 = vpop.permute.xlu0 %325
      %328 = vset.pattern.permute.xlu0 0
      %329 = vperm.xlu0 %328, %v315
      %v330 = vpop.permute.xlu0 %329
      %332 = vset.pattern.permute.xlu0 0
      %333 = vperm.xlu0 %332, %v319
      %v334 = vpop.permute.xlu0 %333
      %336 = vset.pattern.permute.xlu0 0
      %337 = vperm.xlu0 %336, %v323
      %v338 = vpop.permute.xlu0 %337
      %v340 = vmul.f32 %v288, %v326
      %v341 = vmul.f32 %v289, %v326
      %v342 = vmul.f32 %v288, %v330
      %v343 = vmul.f32 %v289, %v330
      %v344 = vmul.f32 %v288, %v334
      %v345 = vmul.f32 %v289, %v334
      %v346 = vmul.f32 %v288, %v338
      %v347 = vmul.f32 %v289, %v338
      %v348 = vadd.f32 %v340, 0.0
      %v349 = vadd.f32 %v341, 0.0
      %v350 = vadd.f32 %v342, 0.0
      %v351 = vadd.f32 %v343, 0.0
      %v352 = vadd.f32 %v344, 0.0
      %v353 = vadd.f32 %v345, 0.0
      %v354 = vadd.f32 %v346, 0.0
      %v355 = vadd.f32 %v347, 0.0
      %356 = vset.pattern.permute.xlu0 1
      %357 = vperm.xlu0 %356, %v311
      %v358 = vpop.permute.xlu0 %357
      %360 = vset.pattern.permute.xlu0 1
      %361 = vperm.xlu0 %360, %v315
      %v362 = vpop.permute.xlu0 %361
      %364 = vset.pattern.permute.xlu0 1
      %365 = vperm.xlu0 %364, %v319
      %v366 = vpop.permute.xlu0 %365
      %368 = vset.pattern.permute.xlu0 1
      %369 = vperm.xlu0 %368, %v323
      %v370 = vpop.permute.xlu0 %369
      %v372 = vmul.f32 %v290, %v358
      %v373 = vmul.f32 %v291, %v358
      %v374 = vmul.f32 %v290, %v362
      %v375 = vmul.f32 %v291, %v362
      %v376 = vmul.f32 %v290, %v366
      %v377 = vmul.f32 %v291, %v366
      %v378 = vmul.f32 %v290, %v370
      %v379 = vmul.f32 %v291, %v370
      %v380 = vadd.f32 %v348, %v372
      %v381 = vadd.f32 %v349, %v373
      %v382 = vadd.f32 %v350, %v374
      %v383 = vadd.f32 %v351, %v375
      %v384 = vadd.f32 %v352, %v376
      %v385 = vadd.f32 %v353, %v377
      %v386 = vadd.f32 %v354, %v378
      %v387 = vadd.f32 %v355, %v379
      %388 = vset.pattern.permute.xlu0 2
      %389 = vperm.xlu0 %388, %v311
      %v390 = vpop.permute.xlu0 %389
      %392 = vset.pattern.permute.xlu0 2
      %393 = vperm.xlu0 %392, %v315
      %v394 = vpop.permute.xlu0 %393
      %396 = vset.pattern.permute.xlu0 2
      %397 = vperm.xlu0 %396, %v319
      %v398 = vpop.permute.xlu0 %397
      %400 = vset.pattern.permute.xlu0 2
      %401 = vperm.xlu0 %400, %v323
      %v402 = vpop.permute.xlu0 %401
      %v404 = vmul.f32 %v292, %v390
      %v405 = vmul.f32 %v293, %v390
      %v406 = vmul.f32 %v292, %v394
      %v407 = vmul.f32 %v293, %v394
      %v408 = vmul.f32 %v292, %v398
      %v409 = vmul.f32 %v293, %v398
      %v410 = vmul.f32 %v292, %v402
      %v411 = vmul.f32 %v293, %v402
      %v412 = vadd.f32 %v380, %v404
      %v413 = vadd.f32 %v381, %v405
      %v414 = vadd.f32 %v382, %v406
      %v415 = vadd.f32 %v383, %v407
      %v416 = vadd.f32 %v384, %v408
      %v417 = vadd.f32 %v385, %v409
      %v418 = vadd.f32 %v386, %v410
      %v419 = vadd.f32 %v387, %v411
      %420 = vset.pattern.permute.xlu0 3
      %421 = vperm.xlu0 %420, %v311
      %v422 = vpop.permute.xlu0 %421
      %424 = vset.pattern.permute.xlu0 3
      %425 = vperm.xlu0 %424, %v315
      %v426 = vpop.permute.xlu0 %425
      %428 = vset.pattern.permute.xlu0 3
      %429 = vperm.xlu0 %428, %v319
      %v430 = vpop.permute.xlu0 %429
      %432 = vset.pattern.permute.xlu0 3
      %433 = vperm.xlu0 %432, %v323
      %v434 = vpop.permute.xlu0 %433
      %v436 = vmul.f32 %v294, %v422
      %v437 = vmul.f32 %v295, %v422
      %v438 = vmul.f32 %v294, %v426
      %v439 = vmul.f32 %v295, %v426
      %v440 = vmul.f32 %v294, %v430
      %v441 = vmul.f32 %v295, %v430
      %v442 = vmul.f32 %v294, %v434
      %v443 = vmul.f32 %v295, %v434
      %v444 = vadd.f32 %v412, %v436
      %v445 = vadd.f32 %v413, %v437
      %v446 = vadd.f32 %v414, %v438
      %v447 = vadd.f32 %v415, %v439
      %v448 = vadd.f32 %v416, %v440
      %v449 = vadd.f32 %v417, %v441
      %v450 = vadd.f32 %v418, %v442
      %v451 = vadd.f32 %v419, %v443
      %v456 = vlaneseq
      %v457 = vshrl.u32 %v456, 7
      %v458 = vsub.s32 0, %v457
      %v459 = vrot.slane %v296, %v458
      %v460 = vlaneseq
      %v461 = vshrl.u32 %v460, 7
      %v462 = vsub.s32 0, %v461
      %v463 = vrot.slane %v297, %v462
      %v464 = vlaneseq
      %v465 = vshrl.u32 %v464, 7
      %v466 = vsub.s32 0, %v465
      %v467 = vrot.slane %v298, %v466
      %v468 = vlaneseq
      %v469 = vshrl.u32 %v468, 7
      %v470 = vsub.s32 0, %v469
      %v471 = vrot.slane %v299, %v470
      %472 = vset.pattern.permute.xlu0 0
      %473 = vperm.xlu0 %472, %v459
      %v474 = vpop.permute.xlu0 %473
      %476 = vset.pattern.permute.xlu0 0
      %477 = vperm.xlu0 %476, %v463
      %v478 = vpop.permute.xlu0 %477
      %480 = vset.pattern.permute.xlu0 0
      %481 = vperm.xlu0 %480, %v467
      %v482 = vpop.permute.xlu0 %481
      %484 = vset.pattern.permute.xlu0 0
      %485 = vperm.xlu0 %484, %v471
      %v486 = vpop.permute.xlu0 %485
      %v488 = vadd.f32 %v444, %v474
      %v489 = vadd.f32 %v445, %v474
      %v490 = vadd.f32 %v446, %v478
      %v491 = vadd.f32 %v447, %v478
      %v492 = vadd.f32 %v448, %v482
      %v493 = vadd.f32 %v449, %v482
      %v494 = vadd.f32 %v450, %v486
      %v495 = vadd.f32 %v451, %v486
      %v496 = vxor.u32 %v488, 2147483648
      %v497 = vxor.u32 %v489, 2147483648
      %v498 = vxor.u32 %v490, 2147483648
      %v499 = vxor.u32 %v491, 2147483648
      %v500 = vxor.u32 %v492, 2147483648
      %v501 = vxor.u32 %v493, 2147483648
      %v502 = vxor.u32 %v494, 2147483648
      %v503 = vxor.u32 %v495, 2147483648
      %v504 = vmul.f32 %v496, 1.442695
      %v505 = vpow.pop %v504
      %v506 = vmul.f32 %v497, 1.442695
      %v507 = vpow.pop %v506
      %v508 = vmul.f32 %v498, 1.442695
      %v509 = vpow.pop %v508
      %v510 = vmul.f32 %v499, 1.442695
      %v511 = vpow.pop %v510
      %v512 = vmul.f32 %v500, 1.442695
      %v513 = vpow.pop %v512
      %v514 = vmul.f32 %v501, 1.442695
      %v515 = vpow.pop %v514
      %v516 = vmul.f32 %v502, 1.442695
      %v517 = vpow.pop %v516
      %v518 = vmul.f32 %v503, 1.442695
      %v519 = vpow.pop %v518
      %v520 = vadd.f32 %v505, 1.0
      %v521 = vadd.f32 %v507, 1.0
      %v522 = vadd.f32 %v509, 1.0
      %v523 = vadd.f32 %v511, 1.0
      %v524 = vadd.f32 %v513, 1.0
      %v525 = vadd.f32 %v515, 1.0
      %v526 = vadd.f32 %v517, 1.0
      %v527 = vadd.f32 %v519, 1.0
      %v528 = vrcp.pop %v520
      %v529 = vmul.f32 1.0, %v528
      %v530 = vrcp.pop %v521
      %v531 = vmul.f32 1.0, %v530
      %v532 = vrcp.pop %v522
      %v533 = vmul.f32 1.0, %v532
      %v534 = vrcp.pop %v523
      %v535 = vmul.f32 1.0, %v534
      %v536 = vrcp.pop %v524
      %v537 = vmul.f32 1.0, %v536
      %v538 = vrcp.pop %v525
      %v539 = vmul.f32 1.0, %v538
      %v540 = vrcp.pop %v526
      %v541 = vmul.f32 1.0, %v540
      %v542 = vrcp.pop %v527
      %v543 = vmul.f32 1.0, %v542
      %v544 = vmul.f32 %v488, %v529
      %v545 = vmul.f32 %v489, %v531
      %v546 = vmul.f32 %v490, %v533
      %v547 = vmul.f32 %v491, %v535
      %v548 = vmul.f32 %v492, %v537
      %v549 = vmul.f32 %v493, %v539
      %v550 = vmul.f32 %v494, %v541
      %v551 = vmul.f32 %v495, %v543
      %s552 = ssub.s32 %s286, %s245
      %s553 = sadd.s32 %s552, 4
      %562 = vrot.lane.b32.xlu0 %v544, 2
      %v563 = vpop.permute.xlu0 %562
      %564 = vrot.lane.b32.xlu0 %v545, 2
      %v565 = vpop.permute.xlu0 %564
      %566 = vrot.lane.b32.xlu0 %v546, 2
      %v567 = vpop.permute.xlu0 %566
      %568 = vrot.lane.b32.xlu0 %v547, 2
      %v569 = vpop.permute.xlu0 %568
      %570 = vrot.lane.b32.xlu0 %v548, 2
      %v571 = vpop.permute.xlu0 %570
      %572 = vrot.lane.b32.xlu0 %v549, 2
      %v573 = vpop.permute.xlu0 %572
      %574 = vrot.lane.b32.xlu0 %v550, 2
      %v575 = vpop.permute.xlu0 %574
      %576 = vrot.lane.b32.xlu0 %v551, 2
      %v577 = vpop.permute.xlu0 %576
      %s586 = scalar_lea.vmem [#allocation2], %s553
      %vm587 = vcmask 146448
      %588 = vst.msk [vmem:[%s586] sm:$0xff] %vm587, %v563
      %vm589 = vcmask 142352
      %590 = vst.msk [vmem:[%s586 + $0x8] sm:$0xf] %vm589, %v565
      %591 = vst.msk [vmem:[%s586 + $0x10] sm:$0xff] %vm587, %v567
      %592 = vst.msk [vmem:[%s586 + $0x18] sm:$0xf] %vm589, %v569
      %593 = vst.msk [vmem:[%s586 + $0x20] sm:$0xff] %vm587, %v571
      %594 = vst.msk [vmem:[%s586 + $0x28] sm:$0xf] %vm589, %v573
      %595 = vst.msk [vmem:[%s586 + $0x30] sm:$0xff] %vm587, %v575
      %596 = vst.msk [vmem:[%s586 + $0x38] sm:$0xf] %vm589, %v577
      %v597 = vld [vmem:[%s3] sm:$0x1]
      %v598 = vld [vmem:[%s3 + $0x1] sm:$0x1]
      %v599 = vld [vmem:[%s3 + $0x2] sm:$0x1]
      %v600 = vld [vmem:[%s3 + $0x3] sm:$0x1]
      %v601 = vld [vmem:[%s4] sm:$0x1]
      %v602 = vld [vmem:[%s4 + $0x1] sm:$0x1]
      %v603 = vld [vmem:[%s4 + $0x2] sm:$0x1]
      %v604 = vld [vmem:[%s4 + $0x3] sm:$0x1]
      %v605 = vld [vmem:[#allocation2 + $0x2] sm:$0xff]
      %v606 = vld [vmem:[#allocation2 + $0xa] sm:$0xf]
      %v607 = vld [vmem:[#allocation2 + $0x12] sm:$0xff]
      %v608 = vld [vmem:[#allocation2 + $0x1a] sm:$0xf]
      %v609 = vld [vmem:[#allocation2 + $0x22] sm:$0xff]
      %v610 = vld [vmem:[#allocation2 + $0x2a] sm:$0xf]
      %v611 = vld [vmem:[#allocation2 + $0x32] sm:$0xff]
      %v612 = vld [vmem:[#allocation2 + $0x3a] sm:$0xf]
      %v617 = vlaneseq
      %v618 = vshrl.u32 %v617, 7
      %v619 = vsub.s32 0, %v618
      %v620 = vrot.slane %v597, %v619
      %v621 = vlaneseq
      %v622 = vshrl.u32 %v621, 7
      %v623 = vsub.s32 0, %v622
      %v624 = vrot.slane %v598, %v623
      %v625 = vlaneseq
      %v626 = vshrl.u32 %v625, 7
      %v627 = vsub.s32 0, %v626
      %v628 = vrot.slane %v599, %v627
      %v629 = vlaneseq
      %v630 = vshrl.u32 %v629, 7
      %v631 = vsub.s32 0, %v630
      %v632 = vrot.slane %v600, %v631
      %633 = vset.pattern.permute.xlu0 0
      %634 = vperm.xlu0 %633, %v620
      %v635 = vpop.permute.xlu0 %634
      %637 = vset.pattern.permute.xlu0 0
      %638 = vperm.xlu0 %637, %v624
      %v639 = vpop.permute.xlu0 %638
      %641 = vset.pattern.permute.xlu0 0
      %642 = vperm.xlu0 %641, %v628
      %v643 = vpop.permute.xlu0 %642
      %645 = vset.pattern.permute.xlu0 0
      %646 = vperm.xlu0 %645, %v632
      %v647 = vpop.permute.xlu0 %646
      %v649 = vmul.f32 %v605, %v635
      %v650 = vmul.f32 %v607, %v639
      %v651 = vmul.f32 %v609, %v643
      %v652 = vmul.f32 %v611, %v647
      %v653 = vadd.f32 %v649, 0.0
      %v654 = vadd.f32 %v650, 0.0
      %v655 = vadd.f32 %v651, 0.0
      %v656 = vadd.f32 %v652, 0.0
      %657 = vset.pattern.permute.xlu0 5
      %658 = vperm.xlu0 %657, %v620
      %v659 = vpop.permute.xlu0 %658
      %661 = vset.pattern.permute.xlu0 5
      %662 = vperm.xlu0 %661, %v624
      %v663 = vpop.permute.xlu0 %662
      %665 = vset.pattern.permute.xlu0 5
      %666 = vperm.xlu0 %665, %v628
      %v667 = vpop.permute.xlu0 %666
      %669 = vset.pattern.permute.xlu0 5
      %670 = vperm.xlu0 %669, %v632
      %v671 = vpop.permute.xlu0 %670
      %v673 = vmul.f32 %v605, %v659
      %v674 = vmul.f32 %v606, %v659
      %v675 = vmul.f32 %v607, %v663
      %v676 = vmul.f32 %v608, %v663
      %v677 = vmul.f32 %v609, %v667
      %v678 = vmul.f32 %v610, %v667
      %v679 = vmul.f32 %v611, %v671
      %v680 = vmul.f32 %v612, %v671
      %vm689 = vcmask 1046528
      %v690 = vrot.slane %v673, 1
      %v691 = vrot.slane %v674, 1
      %v692 = vsel %vm689, %v690, %v691
      %v693 = vrot.slane %v675, 1
      %v694 = vrot.slane %v676, 1
      %v695 = vsel %vm689, %v693, %v694
      %v696 = vrot.slane %v677, 1
      %v697 = vrot.slane %v678, 1
      %v698 = vsel %vm689, %v696, %v697
      %v699 = vrot.slane %v679, 1
      %v700 = vrot.slane %v680, 1
      %v701 = vsel %vm689, %v699, %v700
      %v706 = vadd.f32 %v653, %v692
      %v707 = vadd.f32 %v654, %v695
      %v708 = vadd.f32 %v655, %v698
      %v709 = vadd.f32 %v656, %v701
      %710 = vset.pattern.permute.xlu0 10
      %711 = vperm.xlu0 %710, %v620
      %v712 = vpop.permute.xlu0 %711
      %714 = vset.pattern.permute.xlu0 10
      %715 = vperm.xlu0 %714, %v624
      %v716 = vpop.permute.xlu0 %715
      %718 = vset.pattern.permute.xlu0 10
      %719 = vperm.xlu0 %718, %v628
      %v720 = vpop.permute.xlu0 %719
      %722 = vset.pattern.permute.xlu0 10
      %723 = vperm.xlu0 %722, %v632
      %v724 = vpop.permute.xlu0 %723
      %v726 = vmul.f32 %v605, %v712
      %v727 = vmul.f32 %v606, %v712
      %v728 = vmul.f32 %v607, %v716
      %v729 = vmul.f32 %v608, %v716
      %v730 = vmul.f32 %v609, %v720
      %v731 = vmul.f32 %v610, %v720
      %v732 = vmul.f32 %v611, %v724
      %v733 = vmul.f32 %v612, %v724
      %vm742 = vcmask 1045504
      %v743 = vrot.slane %v726, 2
      %v744 = vrot.slane %v727, 2
      %v745 = vsel %vm742, %v743, %v744
      %v746 = vrot.slane %v728, 2
      %v747 = vrot.slane %v729, 2
      %v748 = vsel %vm742, %v746, %v747
      %v749 = vrot.slane %v730, 2
      %v750 = vrot.slane %v731, 2
      %v751 = vsel %vm742, %v749, %v750
      %v752 = vrot.slane %v732, 2
      %v753 = vrot.slane %v733, 2
      %v754 = vsel %vm742, %v752, %v753
      %v759 = vadd.f32 %v706, %v745
      %v760 = vadd.f32 %v707, %v748
      %v761 = vadd.f32 %v708, %v751
      %v762 = vadd.f32 %v709, %v754
      %763 = vset.pattern.permute.xlu0 15
      %764 = vperm.xlu0 %763, %v620
      %v765 = vpop.permute.xlu0 %764
      %767 = vset.pattern.permute.xlu0 15
      %768 = vperm.xlu0 %767, %v624
      %v769 = vpop.permute.xlu0 %768
      %771 = vset.pattern.permute.xlu0 15
      %772 = vperm.xlu0 %771, %v628
      %v773 = vpop.permute.xlu0 %772
      %775 = vset.pattern.permute.xlu0 15
      %776 = vperm.xlu0 %775, %v632
      %v777 = vpop.permute.xlu0 %776
      %v779 = vmul.f32 %v605, %v765
      %v780 = vmul.f32 %v606, %v765
      %v781 = vmul.f32 %v607, %v769
      %v782 = vmul.f32 %v608, %v769
      %v783 = vmul.f32 %v609, %v773
      %v784 = vmul.f32 %v610, %v773
      %v785 = vmul.f32 %v611, %v777
      %v786 = vmul.f32 %v612, %v777
      %vm795 = vcmask 1044480
      %v796 = vrot.slane %v779, 3
      %v797 = vrot.slane %v780, 3
      %v798 = vsel %vm795, %v796, %v797
      %v799 = vrot.slane %v781, 3
      %v800 = vrot.slane %v782, 3
      %v801 = vsel %vm795, %v799, %v800
      %v802 = vrot.slane %v783, 3
      %v803 = vrot.slane %v784, 3
      %v804 = vsel %vm795, %v802, %v803
      %v805 = vrot.slane %v785, 3
      %v806 = vrot.slane %v786, 3
      %v807 = vsel %vm795, %v805, %v806
      %v812 = vadd.f32 %v759, %v798
      %v813 = vadd.f32 %v760, %v801
      %v814 = vadd.f32 %v761, %v804
      %v815 = vadd.f32 %v762, %v807
      %816 = vset.pattern.permute.xlu0 20
      %817 = vperm.xlu0 %816, %v620
      %v818 = vpop.permute.xlu0 %817
      %820 = vset.pattern.permute.xlu0 20
      %821 = vperm.xlu0 %820, %v624
      %v822 = vpop.permute.xlu0 %821
      %824 = vset.pattern.permute.xlu0 20
      %825 = vperm.xlu0 %824, %v628
      %v826 = vpop.permute.xlu0 %825
      %828 = vset.pattern.permute.xlu0 20
      %829 = vperm.xlu0 %828, %v632
      %v830 = vpop.permute.xlu0 %829
      %v832 = vmul.f32 %v605, %v818
      %v833 = vmul.f32 %v606, %v818
      %v834 = vmul.f32 %v607, %v822
      %v835 = vmul.f32 %v608, %v822
      %v836 = vmul.f32 %v609, %v826
      %v837 = vmul.f32 %v610, %v826
      %v838 = vmul.f32 %v611, %v830
      %v839 = vmul.f32 %v612, %v830
      %vm848 = vcmask 1043456
      %v849 = vrot.slane %v832, 4
      %v850 = vrot.slane %v833, 4
      %v851 = vsel %vm848, %v849, %v850
      %v852 = vrot.slane %v834, 4
      %v853 = vrot.slane %v835, 4
      %v854 = vsel %vm848, %v852, %v853
      %v855 = vrot.slane %v836, 4
      %v856 = vrot.slane %v837, 4
      %v857 = vsel %vm848, %v855, %v856
      %v858 = vrot.slane %v838, 4
      %v859 = vrot.slane %v839, 4
      %v860 = vsel %vm848, %v858, %v859
      %v865 = vadd.f32 %v812, %v851
      %v866 = vadd.f32 %v813, %v854
      %v867 = vadd.f32 %v814, %v857
      %v868 = vadd.f32 %v815, %v860
      %869 = vset.pattern.permute.xlu0 1
      %870 = vperm.xlu0 %869, %v620
      %v871 = vpop.permute.xlu0 %870
      %873 = vset.pattern.permute.xlu0 1
      %874 = vperm.xlu0 %873, %v624
      %v875 = vpop.permute.xlu0 %874
      %877 = vset.pattern.permute.xlu0 1
      %878 = vperm.xlu0 %877, %v628
      %v879 = vpop.permute.xlu0 %878
      %881 = vset.pattern.permute.xlu0 1
      %882 = vperm.xlu0 %881, %v632
      %v883 = vpop.permute.xlu0 %882
      %v885 = vmul.f32 %v605, %v871
      %v886 = vmul.f32 %v607, %v875
      %v887 = vmul.f32 %v609, %v879
      %v888 = vmul.f32 %v611, %v883
      %893 = vrot.lane.b32.xlu0 %v885, 127
      %v894 = vpop.permute.xlu0 %893
      %895 = vrot.lane.b32.xlu0 %v886, 127
      %v896 = vpop.permute.xlu0 %895
      %897 = vrot.lane.b32.xlu0 %v887, 127
      %v898 = vpop.permute.xlu0 %897
      %899 = vrot.lane.b32.xlu0 %v888, 127
      %v900 = vpop.permute.xlu0 %899
      %v905 = vadd.f32 %v865, %v894
      %v906 = vadd.f32 %v866, %v896
      %v907 = vadd.f32 %v867, %v898
      %v908 = vadd.f32 %v868, %v900
      %909 = vset.pattern.permute.xlu0 6
      %910 = vperm.xlu0 %909, %v620
      %v911 = vpop.permute.xlu0 %910
      %913 = vset.pattern.permute.xlu0 6
      %914 = vperm.xlu0 %913, %v624
      %v915 = vpop.permute.xlu0 %914
      %917 = vset.pattern.permute.xlu0 6
      %918 = vperm.xlu0 %917, %v628
      %v919 = vpop.permute.xlu0 %918
      %921 = vset.pattern.permute.xlu0 6
      %922 = vperm.xlu0 %921, %v632
      %v923 = vpop.permute.xlu0 %922
      %v925 = vmul.f32 %v605, %v911
      %v926 = vmul.f32 %v606, %v911
      %v927 = vmul.f32 %v607, %v915
      %v928 = vmul.f32 %v608, %v915
      %v929 = vmul.f32 %v609, %v919
      %v930 = vmul.f32 %v610, %v919
      %v931 = vmul.f32 %v611, %v923
      %v932 = vmul.f32 %v612, %v923
      %v941 = vrot.slane %v925, 1
      %v942 = vrot.slane %v926, 1
      %v943 = vsel %vm689, %v941, %v942
      %v944 = vrot.slane %v927, 1
      %v945 = vrot.slane %v928, 1
      %v946 = vsel %vm689, %v944, %v945
      %v947 = vrot.slane %v929, 1
      %v948 = vrot.slane %v930, 1
      %v949 = vsel %vm689, %v947, %v948
      %v950 = vrot.slane %v931, 1
      %v951 = vrot.slane %v932, 1
      %v952 = vsel %vm689, %v950, %v951
      %953 = vrot.lane.b32.xlu0 %v943, 127
      %v954 = vpop.permute.xlu0 %953
      %955 = vrot.lane.b32.xlu0 %v946, 127
      %v956 = vpop.permute.xlu0 %955
      %957 = vrot.lane.b32.xlu0 %v949, 127
      %v958 = vpop.permute.xlu0 %957
      %959 = vrot.lane.b32.xlu0 %v952, 127
      %v960 = vpop.permute.xlu0 %959
      %v965 = vadd.f32 %v905, %v954
      %v966 = vadd.f32 %v906, %v956
      %v967 = vadd.f32 %v907, %v958
      %v968 = vadd.f32 %v908, %v960
      %969 = vset.pattern.permute.xlu0 11
      %970 = vperm.xlu0 %969, %v620
      %v971 = vpop.permute.xlu0 %970
      %973 = vset.pattern.permute.xlu0 11
      %974 = vperm.xlu0 %973, %v624
      %v975 = vpop.permute.xlu0 %974
      %977 = vset.pattern.permute.xlu0 11
      %978 = vperm.xlu0 %977, %v628
      %v979 = vpop.permute.xlu0 %978
      %981 = vset.pattern.permute.xlu0 11
      %982 = vperm.xlu0 %981, %v632
      %v983 = vpop.permute.xlu0 %982
      %v985 = vmul.f32 %v605, %v971
      %v986 = vmul.f32 %v606, %v971
      %v987 = vmul.f32 %v607, %v975
      %v988 = vmul.f32 %v608, %v975
      %v989 = vmul.f32 %v609, %v979
      %v990 = vmul.f32 %v610, %v979
      %v991 = vmul.f32 %v611, %v983
      %v992 = vmul.f32 %v612, %v983
      %v1001 = vrot.slane %v985, 2
      %v1002 = vrot.slane %v986, 2
      %v1003 = vsel %vm742, %v1001, %v1002
      %v1004 = vrot.slane %v987, 2
      %v1005 = vrot.slane %v988, 2
      %v1006 = vsel %vm742, %v1004, %v1005
      %v1007 = vrot.slane %v989, 2
      %v1008 = vrot.slane %v990, 2
      %v1009 = vsel %vm742, %v1007, %v1008
      %v1010 = vrot.slane %v991, 2
      %v1011 = vrot.slane %v992, 2
      %v1012 = vsel %vm742, %v1010, %v1011
      %1013 = vrot.lane.b32.xlu0 %v1003, 127
      %v1014 = vpop.permute.xlu0 %1013
      %1015 = vrot.lane.b32.xlu0 %v1006, 127
      %v1016 = vpop.permute.xlu0 %1015
      %1017 = vrot.lane.b32.xlu0 %v1009, 127
      %v1018 = vpop.permute.xlu0 %1017
      %1019 = vrot.lane.b32.xlu0 %v1012, 127
      %v1020 = vpop.permute.xlu0 %1019
      %v1025 = vadd.f32 %v965, %v1014
      %v1026 = vadd.f32 %v966, %v1016
      %v1027 = vadd.f32 %v967, %v1018
      %v1028 = vadd.f32 %v968, %v1020
      %1029 = vset.pattern.permute.xlu0 16
      %1030 = vperm.xlu0 %1029, %v620
      %v1031 = vpop.permute.xlu0 %1030
      %1033 = vset.pattern.permute.xlu0 16
      %1034 = vperm.xlu0 %1033, %v624
      %v1035 = vpop.permute.xlu0 %1034
      %1037 = vset.pattern.permute.xlu0 16
      %1038 = vperm.xlu0 %1037, %v628
      %v1039 = vpop.permute.xlu0 %1038
      %1041 = vset.pattern.permute.xlu0 16
      %1042 = vperm.xlu0 %1041, %v632
      %v1043 = vpop.permute.xlu0 %1042
      %v1045 = vmul.f32 %v605, %v1031
      %v1046 = vmul.f32 %v606, %v1031
      %v1047 = vmul.f32 %v607, %v1035
      %v1048 = vmul.f32 %v608, %v1035
      %v1049 = vmul.f32 %v609, %v1039
      %v1050 = vmul.f32 %v610, %v1039
      %v1051 = vmul.f32 %v611, %v1043
      %v1052 = vmul.f32 %v612, %v1043
      %v1061 = vrot.slane %v1045, 3
      %v1062 = vrot.slane %v1046, 3
      %v1063 = vsel %vm795, %v1061, %v1062
      %v1064 = vrot.slane %v1047, 3
      %v1065 = vrot.slane %v1048, 3
      %v1066 = vsel %vm795, %v1064, %v1065
      %v1067 = vrot.slane %v1049, 3
      %v1068 = vrot.slane %v1050, 3
      %v1069 = vsel %vm795, %v1067, %v1068
      %v1070 = vrot.slane %v1051, 3
      %v1071 = vrot.slane %v1052, 3
      %v1072 = vsel %vm795, %v1070, %v1071
      %1073 = vrot.lane.b32.xlu0 %v1063, 127
      %v1074 = vpop.permute.xlu0 %1073
      %1075 = vrot.lane.b32.xlu0 %v1066, 127
      %v1076 = vpop.permute.xlu0 %1075
      %1077 = vrot.lane.b32.xlu0 %v1069, 127
      %v1078 = vpop.permute.xlu0 %1077
      %1079 = vrot.lane.b32.xlu0 %v1072, 127
      %v1080 = vpop.permute.xlu0 %1079
      %v1085 = vadd.f32 %v1025, %v1074
      %v1086 = vadd.f32 %v1026, %v1076
      %v1087 = vadd.f32 %v1027, %v1078
      %v1088 = vadd.f32 %v1028, %v1080
      %1089 = vset.pattern.permute.xlu0 21
      %1090 = vperm.xlu0 %1089, %v620
      %v1091 = vpop.permute.xlu0 %1090
      %1093 = vset.pattern.permute.xlu0 21
      %1094 = vperm.xlu0 %1093, %v624
      %v1095 = vpop.permute.xlu0 %1094
      %1097 = vset.pattern.permute.xlu0 21
      %1098 = vperm.xlu0 %1097, %v628
      %v1099 = vpop.permute.xlu0 %1098
      %1101 = vset.pattern.permute.xlu0 21
      %1102 = vperm.xlu0 %1101, %v632
      %v1103 = vpop.permute.xlu0 %1102
      %v1105 = vmul.f32 %v605, %v1091
      %v1106 = vmul.f32 %v606, %v1091
      %v1107 = vmul.f32 %v607, %v1095
      %v1108 = vmul.f32 %v608, %v1095
      %v1109 = vmul.f32 %v609, %v1099
      %v1110 = vmul.f32 %v610, %v1099
      %v1111 = vmul.f32 %v611, %v1103
      %v1112 = vmul.f32 %v612, %v1103
      %v1121 = vrot.slane %v1105, 4
      %v1122 = vrot.slane %v1106, 4
      %v1123 = vsel %vm848, %v1121, %v1122
      %v1124 = vrot.slane %v1107, 4
      %v1125 = vrot.slane %v1108, 4
      %v1126 = vsel %vm848, %v1124, %v1125
      %v1127 = vrot.slane %v1109, 4
      %v1128 = vrot.slane %v1110, 4
      %v1129 = vsel %vm848, %v1127, %v1128
      %v1130 = vrot.slane %v1111, 4
      %v1131 = vrot.slane %v1112, 4
      %v1132 = vsel %vm848, %v1130, %v1131
      %1133 = vrot.lane.b32.xlu0 %v1123, 127
      %v1134 = vpop.permute.xlu0 %1133
      %1135 = vrot.lane.b32.xlu0 %v1126, 127
      %v1136 = vpop.permute.xlu0 %1135
      %1137 = vrot.lane.b32.xlu0 %v1129, 127
      %v1138 = vpop.permute.xlu0 %1137
      %1139 = vrot.lane.b32.xlu0 %v1132, 127
      %v1140 = vpop.permute.xlu0 %1139
      %v1145 = vadd.f32 %v1085, %v1134
      %v1146 = vadd.f32 %v1086, %v1136
      %v1147 = vadd.f32 %v1087, %v1138
      %v1148 = vadd.f32 %v1088, %v1140
      %1149 = vset.pattern.permute.xlu0 2
      %1150 = vperm.xlu0 %1149, %v620
      %v1151 = vpop.permute.xlu0 %1150
      %1153 = vset.pattern.permute.xlu0 2
      %1154 = vperm.xlu0 %1153, %v624
      %v1155 = vpop.permute.xlu0 %1154
      %1157 = vset.pattern.permute.xlu0 2
      %1158 = vperm.xlu0 %1157, %v628
      %v1159 = vpop.permute.xlu0 %1158
      %1161 = vset.pattern.permute.xlu0 2
      %1162 = vperm.xlu0 %1161, %v632
      %v1163 = vpop.permute.xlu0 %1162
      %v1165 = vmul.f32 %v605, %v1151
      %v1166 = vmul.f32 %v607, %v1155
      %v1167 = vmul.f32 %v609, %v1159
      %v1168 = vmul.f32 %v611, %v1163
      %1173 = vrot.lane.b32.xlu0 %v1165, 126
      %v1174 = vpop.permute.xlu0 %1173
      %1175 = vrot.lane.b32.xlu0 %v1166, 126
      %v1176 = vpop.permute.xlu0 %1175
      %1177 = vrot.lane.b32.xlu0 %v1167, 126
      %v1178 = vpop.permute.xlu0 %1177
      %1179 = vrot.lane.b32.xlu0 %v1168, 126
      %v1180 = vpop.permute.xlu0 %1179
      %v1185 = vadd.f32 %v1145, %v1174
      %v1186 = vadd.f32 %v1146, %v1176
      %v1187 = vadd.f32 %v1147, %v1178
      %v1188 = vadd.f32 %v1148, %v1180
      %1189 = vset.pattern.permute.xlu0 7
      %1190 = vperm.xlu0 %1189, %v620
      %v1191 = vpop.permute.xlu0 %1190
      %1193 = vset.pattern.permute.xlu0 7
      %1194 = vperm.xlu0 %1193, %v624
      %v1195 = vpop.permute.xlu0 %1194
      %1197 = vset.pattern.permute.xlu0 7
      %1198 = vperm.xlu0 %1197, %v628
      %v1199 = vpop.permute.xlu0 %1198
      %1201 = vset.pattern.permute.xlu0 7
      %1202 = vperm.xlu0 %1201, %v632
      %v1203 = vpop.permute.xlu0 %1202
      %v1205 = vmul.f32 %v605, %v1191
      %v1206 = vmul.f32 %v606, %v1191
      %v1207 = vmul.f32 %v607, %v1195
      %v1208 = vmul.f32 %v608, %v1195
      %v1209 = vmul.f32 %v609, %v1199
      %v1210 = vmul.f32 %v610, %v1199
      %v1211 = vmul.f32 %v611, %v1203
      %v1212 = vmul.f32 %v612, %v1203
      %v1221 = vrot.slane %v1205, 1
      %v1222 = vrot.slane %v1206, 1
      %v1223 = vsel %vm689, %v1221, %v1222
      %v1224 = vrot.slane %v1207, 1
      %v1225 = vrot.slane %v1208, 1
      %v1226 = vsel %vm689, %v1224, %v1225
      %v1227 = vrot.slane %v1209, 1
      %v1228 = vrot.slane %v1210, 1
      %v1229 = vsel %vm689, %v1227, %v1228
      %v1230 = vrot.slane %v1211, 1
      %v1231 = vrot.slane %v1212, 1
      %v1232 = vsel %vm689, %v1230, %v1231
      %1233 = vrot.lane.b32.xlu0 %v1223, 126
      %v1234 = vpop.permute.xlu0 %1233
      %1235 = vrot.lane.b32.xlu0 %v1226, 126
      %v1236 = vpop.permute.xlu0 %1235
      %1237 = vrot.lane.b32.xlu0 %v1229, 126
      %v1238 = vpop.permute.xlu0 %1237
      %1239 = vrot.lane.b32.xlu0 %v1232, 126
      %v1240 = vpop.permute.xlu0 %1239
      %v1245 = vadd.f32 %v1185, %v1234
      %v1246 = vadd.f32 %v1186, %v1236
      %v1247 = vadd.f32 %v1187, %v1238
      %v1248 = vadd.f32 %v1188, %v1240
      %1249 = vset.pattern.permute.xlu0 12
      %1250 = vperm.xlu0 %1249, %v620
      %v1251 = vpop.permute.xlu0 %1250
      %1253 = vset.pattern.permute.xlu0 12
      %1254 = vperm.xlu0 %1253, %v624
      %v1255 = vpop.permute.xlu0 %1254
      %1257 = vset.pattern.permute.xlu0 12
      %1258 = vperm.xlu0 %1257, %v628
      %v1259 = vpop.permute.xlu0 %1258
      %1261 = vset.pattern.permute.xlu0 12
      %1262 = vperm.xlu0 %1261, %v632
      %v1263 = vpop.permute.xlu0 %1262
      %v1265 = vmul.f32 %v605, %v1251
      %v1266 = vmul.f32 %v606, %v1251
      %v1267 = vmul.f32 %v607, %v1255
      %v1268 = vmul.f32 %v608, %v1255
      %v1269 = vmul.f32 %v609, %v1259
      %v1270 = vmul.f32 %v610, %v1259
      %v1271 = vmul.f32 %v611, %v1263
      %v1272 = vmul.f32 %v612, %v1263
      %v1281 = vrot.slane %v1265, 2
      %v1282 = vrot.slane %v1266, 2
      %v1283 = vsel %vm742, %v1281, %v1282
      %v1284 = vrot.slane %v1267, 2
      %v1285 = vrot.slane %v1268, 2
      %v1286 = vsel %vm742, %v1284, %v1285
      %v1287 = vrot.slane %v1269, 2
      %v1288 = vrot.slane %v1270, 2
      %v1289 = vsel %vm742, %v1287, %v1288
      %v1290 = vrot.slane %v1271, 2
      %v1291 = vrot.slane %v1272, 2
      %v1292 = vsel %vm742, %v1290, %v1291
      %1293 = vrot.lane.b32.xlu0 %v1283, 126
      %v1294 = vpop.permute.xlu0 %1293
      %1295 = vrot.lane.b32.xlu0 %v1286, 126
      %v1296 = vpop.permute.xlu0 %1295
      %1297 = vrot.lane.b32.xlu0 %v1289, 126
      %v1298 = vpop.permute.xlu0 %1297
      %1299 = vrot.lane.b32.xlu0 %v1292, 126
      %v1300 = vpop.permute.xlu0 %1299
      %v1305 = vadd.f32 %v1245, %v1294
      %v1306 = vadd.f32 %v1246, %v1296
      %v1307 = vadd.f32 %v1247, %v1298
      %v1308 = vadd.f32 %v1248, %v1300
      %1309 = vset.pattern.permute.xlu0 17
      %1310 = vperm.xlu0 %1309, %v620
      %v1311 = vpop.permute.xlu0 %1310
      %1313 = vset.pattern.permute.xlu0 17
      %1314 = vperm.xlu0 %1313, %v624
      %v1315 = vpop.permute.xlu0 %1314
      %1317 = vset.pattern.permute.xlu0 17
      %1318 = vperm.xlu0 %1317, %v628
      %v1319 = vpop.permute.xlu0 %1318
      %1321 = vset.pattern.permute.xlu0 17
      %1322 = vperm.xlu0 %1321, %v632
      %v1323 = vpop.permute.xlu0 %1322
      %v1325 = vmul.f32 %v605, %v1311
      %v1326 = vmul.f32 %v606, %v1311
      %v1327 = vmul.f32 %v607, %v1315
      %v1328 = vmul.f32 %v608, %v1315
      %v1329 = vmul.f32 %v609, %v1319
      %v1330 = vmul.f32 %v610, %v1319
      %v1331 = vmul.f32 %v611, %v1323
      %v1332 = vmul.f32 %v612, %v1323
      %v1341 = vrot.slane %v1325, 3
      %v1342 = vrot.slane %v1326, 3
      %v1343 = vsel %vm795, %v1341, %v1342
      %v1344 = vrot.slane %v1327, 3
      %v1345 = vrot.slane %v1328, 3
      %v1346 = vsel %vm795, %v1344, %v1345
      %v1347 = vrot.slane %v1329, 3
      %v1348 = vrot.slane %v1330, 3
      %v1349 = vsel %vm795, %v1347, %v1348
      %v1350 = vrot.slane %v1331, 3
      %v1351 = vrot.slane %v1332, 3
      %v1352 = vsel %vm795, %v1350, %v1351
      %1353 = vrot.lane.b32.xlu0 %v1343, 126
      %v1354 = vpop.permute.xlu0 %1353
      %1355 = vrot.lane.b32.xlu0 %v1346, 126
      %v1356 = vpop.permute.xlu0 %1355
      %1357 = vrot.lane.b32.xlu0 %v1349, 126
      %v1358 = vpop.permute.xlu0 %1357
      %1359 = vrot.lane.b32.xlu0 %v1352, 126
      %v1360 = vpop.permute.xlu0 %1359
      %v1365 = vadd.f32 %v1305, %v1354
      %v1366 = vadd.f32 %v1306, %v1356
      %v1367 = vadd.f32 %v1307, %v1358
      %v1368 = vadd.f32 %v1308, %v1360
      %1369 = vset.pattern.permute.xlu0 22
      %1370 = vperm.xlu0 %1369, %v620
      %v1371 = vpop.permute.xlu0 %1370
      %1373 = vset.pattern.permute.xlu0 22
      %1374 = vperm.xlu0 %1373, %v624
      %v1375 = vpop.permute.xlu0 %1374
      %1377 = vset.pattern.permute.xlu0 22
      %1378 = vperm.xlu0 %1377, %v628
      %v1379 = vpop.permute.xlu0 %1378
      %1381 = vset.pattern.permute.xlu0 22
      %1382 = vperm.xlu0 %1381, %v632
      %v1383 = vpop.permute.xlu0 %1382
      %v1385 = vmul.f32 %v605, %v1371
      %v1386 = vmul.f32 %v606, %v1371
      %v1387 = vmul.f32 %v607, %v1375
      %v1388 = vmul.f32 %v608, %v1375
      %v1389 = vmul.f32 %v609, %v1379
      %v1390 = vmul.f32 %v610, %v1379
      %v1391 = vmul.f32 %v611, %v1383
      %v1392 = vmul.f32 %v612, %v1383
      %v1401 = vrot.slane %v1385, 4
      %v1402 = vrot.slane %v1386, 4
      %v1403 = vsel %vm848, %v1401, %v1402
      %v1404 = vrot.slane %v1387, 4
      %v1405 = vrot.slane %v1388, 4
      %v1406 = vsel %vm848, %v1404, %v1405
      %v1407 = vrot.slane %v1389, 4
      %v1408 = vrot.slane %v1390, 4
      %v1409 = vsel %vm848, %v1407, %v1408
      %v1410 = vrot.slane %v1391, 4
      %v1411 = vrot.slane %v1392, 4
      %v1412 = vsel %vm848, %v1410, %v1411
      %1413 = vrot.lane.b32.xlu0 %v1403, 126
      %v1414 = vpop.permute.xlu0 %1413
      %1415 = vrot.lane.b32.xlu0 %v1406, 126
      %v1416 = vpop.permute.xlu0 %1415
      %1417 = vrot.lane.b32.xlu0 %v1409, 126
      %v1418 = vpop.permute.xlu0 %1417
      %1419 = vrot.lane.b32.xlu0 %v1412, 126
      %v1420 = vpop.permute.xlu0 %1419
      %v1425 = vadd.f32 %v1365, %v1414
      %v1426 = vadd.f32 %v1366, %v1416
      %v1427 = vadd.f32 %v1367, %v1418
      %v1428 = vadd.f32 %v1368, %v1420
      %1429 = vset.pattern.permute.xlu0 3
      %1430 = vperm.xlu0 %1429, %v620
      %v1431 = vpop.permute.xlu0 %1430
      %1433 = vset.pattern.permute.xlu0 3
      %1434 = vperm.xlu0 %1433, %v624
      %v1435 = vpop.permute.xlu0 %1434
      %1437 = vset.pattern.permute.xlu0 3
      %1438 = vperm.xlu0 %1437, %v628
      %v1439 = vpop.permute.xlu0 %1438
      %1441 = vset.pattern.permute.xlu0 3
      %1442 = vperm.xlu0 %1441, %v632
      %v1443 = vpop.permute.xlu0 %1442
      %v1445 = vmul.f32 %v605, %v1431
      %v1446 = vmul.f32 %v607, %v1435
      %v1447 = vmul.f32 %v609, %v1439
      %v1448 = vmul.f32 %v611, %v1443
      %1453 = vrot.lane.b32.xlu0 %v1445, 125
      %v1454 = vpop.permute.xlu0 %1453
      %1455 = vrot.lane.b32.xlu0 %v1446, 125
      %v1456 = vpop.permute.xlu0 %1455
      %1457 = vrot.lane.b32.xlu0 %v1447, 125
      %v1458 = vpop.permute.xlu0 %1457
      %1459 = vrot.lane.b32.xlu0 %v1448, 125
      %v1460 = vpop.permute.xlu0 %1459
      %v1465 = vadd.f32 %v1425, %v1454
      %v1466 = vadd.f32 %v1426, %v1456
      %v1467 = vadd.f32 %v1427, %v1458
      %v1468 = vadd.f32 %v1428, %v1460
      %1469 = vset.pattern.permute.xlu0 8
      %1470 = vperm.xlu0 %1469, %v620
      %v1471 = vpop.permute.xlu0 %1470
      %1473 = vset.pattern.permute.xlu0 8
      %1474 = vperm.xlu0 %1473, %v624
      %v1475 = vpop.permute.xlu0 %1474
      %1477 = vset.pattern.permute.xlu0 8
      %1478 = vperm.xlu0 %1477, %v628
      %v1479 = vpop.permute.xlu0 %1478
      %1481 = vset.pattern.permute.xlu0 8
      %1482 = vperm.xlu0 %1481, %v632
      %v1483 = vpop.permute.xlu0 %1482
      %v1485 = vmul.f32 %v605, %v1471
      %v1486 = vmul.f32 %v606, %v1471
      %v1487 = vmul.f32 %v607, %v1475
      %v1488 = vmul.f32 %v608, %v1475
      %v1489 = vmul.f32 %v609, %v1479
      %v1490 = vmul.f32 %v610, %v1479
      %v1491 = vmul.f32 %v611, %v1483
      %v1492 = vmul.f32 %v612, %v1483
      %v1501 = vrot.slane %v1485, 1
      %v1502 = vrot.slane %v1486, 1
      %v1503 = vsel %vm689, %v1501, %v1502
      %v1504 = vrot.slane %v1487, 1
      %v1505 = vrot.slane %v1488, 1
      %v1506 = vsel %vm689, %v1504, %v1505
      %v1507 = vrot.slane %v1489, 1
      %v1508 = vrot.slane %v1490, 1
      %v1509 = vsel %vm689, %v1507, %v1508
      %v1510 = vrot.slane %v1491, 1
      %v1511 = vrot.slane %v1492, 1
      %v1512 = vsel %vm689, %v1510, %v1511
      %1513 = vrot.lane.b32.xlu0 %v1503, 125
      %v1514 = vpop.permute.xlu0 %1513
      %1515 = vrot.lane.b32.xlu0 %v1506, 125
      %v1516 = vpop.permute.xlu0 %1515
      %1517 = vrot.lane.b32.xlu0 %v1509, 125
      %v1518 = vpop.permute.xlu0 %1517
      %1519 = vrot.lane.b32.xlu0 %v1512, 125
      %v1520 = vpop.permute.xlu0 %1519
      %v1525 = vadd.f32 %v1465, %v1514
      %v1526 = vadd.f32 %v1466, %v1516
      %v1527 = vadd.f32 %v1467, %v1518
      %v1528 = vadd.f32 %v1468, %v1520
      %1529 = vset.pattern.permute.xlu0 13
      %1530 = vperm.xlu0 %1529, %v620
      %v1531 = vpop.permute.xlu0 %1530
      %1533 = vset.pattern.permute.xlu0 13
      %1534 = vperm.xlu0 %1533, %v624
      %v1535 = vpop.permute.xlu0 %1534
      %1537 = vset.pattern.permute.xlu0 13
      %1538 = vperm.xlu0 %1537, %v628
      %v1539 = vpop.permute.xlu0 %1538
      %1541 = vset.pattern.permute.xlu0 13
      %1542 = vperm.xlu0 %1541, %v632
      %v1543 = vpop.permute.xlu0 %1542
      %v1545 = vmul.f32 %v605, %v1531
      %v1546 = vmul.f32 %v606, %v1531
      %v1547 = vmul.f32 %v607, %v1535
      %v1548 = vmul.f32 %v608, %v1535
      %v1549 = vmul.f32 %v609, %v1539
      %v1550 = vmul.f32 %v610, %v1539
      %v1551 = vmul.f32 %v611, %v1543
      %v1552 = vmul.f32 %v612, %v1543
      %v1561 = vrot.slane %v1545, 2
      %v1562 = vrot.slane %v1546, 2
      %v1563 = vsel %vm742, %v1561, %v1562
      %v1564 = vrot.slane %v1547, 2
      %v1565 = vrot.slane %v1548, 2
      %v1566 = vsel %vm742, %v1564, %v1565
      %v1567 = vrot.slane %v1549, 2
      %v1568 = vrot.slane %v1550, 2
      %v1569 = vsel %vm742, %v1567, %v1568
      %v1570 = vrot.slane %v1551, 2
      %v1571 = vrot.slane %v1552, 2
      %v1572 = vsel %vm742, %v1570, %v1571
      %1573 = vrot.lane.b32.xlu0 %v1563, 125
      %v1574 = vpop.permute.xlu0 %1573
      %1575 = vrot.lane.b32.xlu0 %v1566, 125
      %v1576 = vpop.permute.xlu0 %1575
      %1577 = vrot.lane.b32.xlu0 %v1569, 125
      %v1578 = vpop.permute.xlu0 %1577
      %1579 = vrot.lane.b32.xlu0 %v1572, 125
      %v1580 = vpop.permute.xlu0 %1579
      %v1585 = vadd.f32 %v1525, %v1574
      %v1586 = vadd.f32 %v1526, %v1576
      %v1587 = vadd.f32 %v1527, %v1578
      %v1588 = vadd.f32 %v1528, %v1580
      %1589 = vset.pattern.permute.xlu0 18
      %1590 = vperm.xlu0 %1589, %v620
      %v1591 = vpop.permute.xlu0 %1590
      %1593 = vset.pattern.permute.xlu0 18
      %1594 = vperm.xlu0 %1593, %v624
      %v1595 = vpop.permute.xlu0 %1594
      %1597 = vset.pattern.permute.xlu0 18
      %1598 = vperm.xlu0 %1597, %v628
      %v1599 = vpop.permute.xlu0 %1598
      %1601 = vset.pattern.permute.xlu0 18
      %1602 = vperm.xlu0 %1601, %v632
      %v1603 = vpop.permute.xlu0 %1602
      %v1605 = vmul.f32 %v605, %v1591
      %v1606 = vmul.f32 %v606, %v1591
      %v1607 = vmul.f32 %v607, %v1595
      %v1608 = vmul.f32 %v608, %v1595
      %v1609 = vmul.f32 %v609, %v1599
      %v1610 = vmul.f32 %v610, %v1599
      %v1611 = vmul.f32 %v611, %v1603
      %v1612 = vmul.f32 %v612, %v1603
      %v1621 = vrot.slane %v1605, 3
      %v1622 = vrot.slane %v1606, 3
      %v1623 = vsel %vm795, %v1621, %v1622
      %v1624 = vrot.slane %v1607, 3
      %v1625 = vrot.slane %v1608, 3
      %v1626 = vsel %vm795, %v1624, %v1625
      %v1627 = vrot.slane %v1609, 3
      %v1628 = vrot.slane %v1610, 3
      %v1629 = vsel %vm795, %v1627, %v1628
      %v1630 = vrot.slane %v1611, 3
      %v1631 = vrot.slane %v1612, 3
      %v1632 = vsel %vm795, %v1630, %v1631
      %1633 = vrot.lane.b32.xlu0 %v1623, 125
      %v1634 = vpop.permute.xlu0 %1633
      %1635 = vrot.lane.b32.xlu0 %v1626, 125
      %v1636 = vpop.permute.xlu0 %1635
      %1637 = vrot.lane.b32.xlu0 %v1629, 125
      %v1638 = vpop.permute.xlu0 %1637
      %1639 = vrot.lane.b32.xlu0 %v1632, 125
      %v1640 = vpop.permute.xlu0 %1639
      %v1645 = vadd.f32 %v1585, %v1634
      %v1646 = vadd.f32 %v1586, %v1636
      %v1647 = vadd.f32 %v1587, %v1638
      %v1648 = vadd.f32 %v1588, %v1640
      %1649 = vset.pattern.permute.xlu0 23
      %1650 = vperm.xlu0 %1649, %v620
      %v1651 = vpop.permute.xlu0 %1650
      %1653 = vset.pattern.permute.xlu0 23
      %1654 = vperm.xlu0 %1653, %v624
      %v1655 = vpop.permute.xlu0 %1654
      %1657 = vset.pattern.permute.xlu0 23
      %1658 = vperm.xlu0 %1657, %v628
      %v1659 = vpop.permute.xlu0 %1658
      %1661 = vset.pattern.permute.xlu0 23
      %1662 = vperm.xlu0 %1661, %v632
      %v1663 = vpop.permute.xlu0 %1662
      %v1665 = vmul.f32 %v605, %v1651
      %v1666 = vmul.f32 %v606, %v1651
      %v1667 = vmul.f32 %v607, %v1655
      %v1668 = vmul.f32 %v608, %v1655
      %v1669 = vmul.f32 %v609, %v1659
      %v1670 = vmul.f32 %v610, %v1659
      %v1671 = vmul.f32 %v611, %v1663
      %v1672 = vmul.f32 %v612, %v1663
      %v1681 = vrot.slane %v1665, 4
      %v1682 = vrot.slane %v1666, 4
      %v1683 = vsel %vm848, %v1681, %v1682
      %v1684 = vrot.slane %v1667, 4
      %v1685 = vrot.slane %v1668, 4
      %v1686 = vsel %vm848, %v1684, %v1685
      %v1687 = vrot.slane %v1669, 4
      %v1688 = vrot.slane %v1670, 4
      %v1689 = vsel %vm848, %v1687, %v1688
      %v1690 = vrot.slane %v1671, 4
      %v1691 = vrot.slane %v1672, 4
      %v1692 = vsel %vm848, %v1690, %v1691
      %1693 = vrot.lane.b32.xlu0 %v1683, 125
      %v1694 = vpop.permute.xlu0 %1693
      %1695 = vrot.lane.b32.xlu0 %v1686, 125
      %v1696 = vpop.permute.xlu0 %1695
      %1697 = vrot.lane.b32.xlu0 %v1689, 125
      %v1698 = vpop.permute.xlu0 %1697
      %1699 = vrot.lane.b32.xlu0 %v1692, 125
      %v1700 = vpop.permute.xlu0 %1699
      %v1705 = vadd.f32 %v1645, %v1694
      %v1706 = vadd.f32 %v1646, %v1696
      %v1707 = vadd.f32 %v1647, %v1698
      %v1708 = vadd.f32 %v1648, %v1700
      %1709 = vset.pattern.permute.xlu0 4
      %1710 = vperm.xlu0 %1709, %v620
      %v1711 = vpop.permute.xlu0 %1710
      %1713 = vset.pattern.permute.xlu0 4
      %1714 = vperm.xlu0 %1713, %v624
      %v1715 = vpop.permute.xlu0 %1714
      %1717 = vset.pattern.permute.xlu0 4
      %1718 = vperm.xlu0 %1717, %v628
      %v1719 = vpop.permute.xlu0 %1718
      %1721 = vset.pattern.permute.xlu0 4
      %1722 = vperm.xlu0 %1721, %v632
      %v1723 = vpop.permute.xlu0 %1722
      %v1725 = vmul.f32 %v605, %v1711
      %v1726 = vmul.f32 %v607, %v1715
      %v1727 = vmul.f32 %v609, %v1719
      %v1728 = vmul.f32 %v611, %v1723
      %1733 = vrot.lane.b32.xlu0 %v1725, 124
      %v1734 = vpop.permute.xlu0 %1733
      %1735 = vrot.lane.b32.xlu0 %v1726, 124
      %v1736 = vpop.permute.xlu0 %1735
      %1737 = vrot.lane.b32.xlu0 %v1727, 124
      %v1738 = vpop.permute.xlu0 %1737
      %1739 = vrot.lane.b32.xlu0 %v1728, 124
      %v1740 = vpop.permute.xlu0 %1739
      %v1745 = vadd.f32 %v1705, %v1734
      %v1746 = vadd.f32 %v1706, %v1736
      %v1747 = vadd.f32 %v1707, %v1738
      %v1748 = vadd.f32 %v1708, %v1740
      %1749 = vset.pattern.permute.xlu0 9
      %1750 = vperm.xlu0 %1749, %v620
      %v1751 = vpop.permute.xlu0 %1750
      %1753 = vset.pattern.permute.xlu0 9
      %1754 = vperm.xlu0 %1753, %v624
      %v1755 = vpop.permute.xlu0 %1754
      %1757 = vset.pattern.permute.xlu0 9
      %1758 = vperm.xlu0 %1757, %v628
      %v1759 = vpop.permute.xlu0 %1758
      %1761 = vset.pattern.permute.xlu0 9
      %1762 = vperm.xlu0 %1761, %v632
      %v1763 = vpop.permute.xlu0 %1762
      %v1765 = vmul.f32 %v605, %v1751
      %v1766 = vmul.f32 %v606, %v1751
      %v1767 = vmul.f32 %v607, %v1755
      %v1768 = vmul.f32 %v608, %v1755
      %v1769 = vmul.f32 %v609, %v1759
      %v1770 = vmul.f32 %v610, %v1759
      %v1771 = vmul.f32 %v611, %v1763
      %v1772 = vmul.f32 %v612, %v1763
      %v1781 = vrot.slane %v1765, 1
      %v1782 = vrot.slane %v1766, 1
      %v1783 = vsel %vm689, %v1781, %v1782
      %v1784 = vrot.slane %v1767, 1
      %v1785 = vrot.slane %v1768, 1
      %v1786 = vsel %vm689, %v1784, %v1785
      %v1787 = vrot.slane %v1769, 1
      %v1788 = vrot.slane %v1770, 1
      %v1789 = vsel %vm689, %v1787, %v1788
      %v1790 = vrot.slane %v1771, 1
      %v1791 = vrot.slane %v1772, 1
      %v1792 = vsel %vm689, %v1790, %v1791
      %1793 = vrot.lane.b32.xlu0 %v1783, 124
      %v1794 = vpop.permute.xlu0 %1793
      %1795 = vrot.lane.b32.xlu0 %v1786, 124
      %v1796 = vpop.permute.xlu0 %1795
      %1797 = vrot.lane.b32.xlu0 %v1789, 124
      %v1798 = vpop.permute.xlu0 %1797
      %1799 = vrot.lane.b32.xlu0 %v1792, 124
      %v1800 = vpop.permute.xlu0 %1799
      %v1805 = vadd.f32 %v1745, %v1794
      %v1806 = vadd.f32 %v1746, %v1796
      %v1807 = vadd.f32 %v1747, %v1798
      %v1808 = vadd.f32 %v1748, %v1800
      %1809 = vset.pattern.permute.xlu0 14
      %1810 = vperm.xlu0 %1809, %v620
      %v1811 = vpop.permute.xlu0 %1810
      %1813 = vset.pattern.permute.xlu0 14
      %1814 = vperm.xlu0 %1813, %v624
      %v1815 = vpop.permute.xlu0 %1814
      %1817 = vset.pattern.permute.xlu0 14
      %1818 = vperm.xlu0 %1817, %v628
      %v1819 = vpop.permute.xlu0 %1818
      %1821 = vset.pattern.permute.xlu0 14
      %1822 = vperm.xlu0 %1821, %v632
      %v1823 = vpop.permute.xlu0 %1822
      %v1825 = vmul.f32 %v605, %v1811
      %v1826 = vmul.f32 %v606, %v1811
      %v1827 = vmul.f32 %v607, %v1815
      %v1828 = vmul.f32 %v608, %v1815
      %v1829 = vmul.f32 %v609, %v1819
      %v1830 = vmul.f32 %v610, %v1819
      %v1831 = vmul.f32 %v611, %v1823
      %v1832 = vmul.f32 %v612, %v1823
      %v1841 = vrot.slane %v1825, 2
      %v1842 = vrot.slane %v1826, 2
      %v1843 = vsel %vm742, %v1841, %v1842
      %v1844 = vrot.slane %v1827, 2
      %v1845 = vrot.slane %v1828, 2
      %v1846 = vsel %vm742, %v1844, %v1845
      %v1847 = vrot.slane %v1829, 2
      %v1848 = vrot.slane %v1830, 2
      %v1849 = vsel %vm742, %v1847, %v1848
      %v1850 = vrot.slane %v1831, 2
      %v1851 = vrot.slane %v1832, 2
      %v1852 = vsel %vm742, %v1850, %v1851
      %1853 = vrot.lane.b32.xlu0 %v1843, 124
      %v1854 = vpop.permute.xlu0 %1853
      %1855 = vrot.lane.b32.xlu0 %v1846, 124
      %v1856 = vpop.permute.xlu0 %1855
      %1857 = vrot.lane.b32.xlu0 %v1849, 124
      %v1858 = vpop.permute.xlu0 %1857
      %1859 = vrot.lane.b32.xlu0 %v1852, 124
      %v1860 = vpop.permute.xlu0 %1859
      %v1865 = vadd.f32 %v1805, %v1854
      %v1866 = vadd.f32 %v1806, %v1856
      %v1867 = vadd.f32 %v1807, %v1858
      %v1868 = vadd.f32 %v1808, %v1860
      %1869 = vset.pattern.permute.xlu0 19
      %1870 = vperm.xlu0 %1869, %v620
      %v1871 = vpop.permute.xlu0 %1870
      %1873 = vset.pattern.permute.xlu0 19
      %1874 = vperm.xlu0 %1873, %v624
      %v1875 = vpop.permute.xlu0 %1874
      %1877 = vset.pattern.permute.xlu0 19
      %1878 = vperm.xlu0 %1877, %v628
      %v1879 = vpop.permute.xlu0 %1878
      %1881 = vset.pattern.permute.xlu0 19
      %1882 = vperm.xlu0 %1881, %v632
      %v1883 = vpop.permute.xlu0 %1882
      %v1885 = vmul.f32 %v605, %v1871
      %v1886 = vmul.f32 %v606, %v1871
      %v1887 = vmul.f32 %v607, %v1875
      %v1888 = vmul.f32 %v608, %v1875
      %v1889 = vmul.f32 %v609, %v1879
      %v1890 = vmul.f32 %v610, %v1879
      %v1891 = vmul.f32 %v611, %v1883
      %v1892 = vmul.f32 %v612, %v1883
      %v1901 = vrot.slane %v1885, 3
      %v1902 = vrot.slane %v1886, 3
      %v1903 = vsel %vm795, %v1901, %v1902
      %v1904 = vrot.slane %v1887, 3
      %v1905 = vrot.slane %v1888, 3
      %v1906 = vsel %vm795, %v1904, %v1905
      %v1907 = vrot.slane %v1889, 3
      %v1908 = vrot.slane %v1890, 3
      %v1909 = vsel %vm795, %v1907, %v1908
      %v1910 = vrot.slane %v1891, 3
      %v1911 = vrot.slane %v1892, 3
      %v1912 = vsel %vm795, %v1910, %v1911
      %1913 = vrot.lane.b32.xlu0 %v1903, 124
      %v1914 = vpop.permute.xlu0 %1913
      %1915 = vrot.lane.b32.xlu0 %v1906, 124
      %v1916 = vpop.permute.xlu0 %1915
      %1917 = vrot.lane.b32.xlu0 %v1909, 124
      %v1918 = vpop.permute.xlu0 %1917
      %1919 = vrot.lane.b32.xlu0 %v1912, 124
      %v1920 = vpop.permute.xlu0 %1919
      %v1925 = vadd.f32 %v1865, %v1914
      %v1926 = vadd.f32 %v1866, %v1916
      %v1927 = vadd.f32 %v1867, %v1918
      %v1928 = vadd.f32 %v1868, %v1920
      %1929 = vset.pattern.permute.xlu0 24
      %1930 = vperm.xlu0 %1929, %v620
      %v1931 = vpop.permute.xlu0 %1930
      %1933 = vset.pattern.permute.xlu0 24
      %1934 = vperm.xlu0 %1933, %v624
      %v1935 = vpop.permute.xlu0 %1934
      %1937 = vset.pattern.permute.xlu0 24
      %1938 = vperm.xlu0 %1937, %v628
      %v1939 = vpop.permute.xlu0 %1938
      %1941 = vset.pattern.permute.xlu0 24
      %1942 = vperm.xlu0 %1941, %v632
      %v1943 = vpop.permute.xlu0 %1942
      %v1945 = vmul.f32 %v605, %v1931
      %v1946 = vmul.f32 %v606, %v1931
      %v1947 = vmul.f32 %v607, %v1935
      %v1948 = vmul.f32 %v608, %v1935
      %v1949 = vmul.f32 %v609, %v1939
      %v1950 = vmul.f32 %v610, %v1939
      %v1951 = vmul.f32 %v611, %v1943
      %v1952 = vmul.f32 %v612, %v1943
      %v1961 = vrot.slane %v1945, 4
      %v1962 = vrot.slane %v1946, 4
      %v1963 = vsel %vm848, %v1961, %v1962
      %v1964 = vrot.slane %v1947, 4
      %v1965 = vrot.slane %v1948, 4
      %v1966 = vsel %vm848, %v1964, %v1965
      %v1967 = vrot.slane %v1949, 4
      %v1968 = vrot.slane %v1950, 4
      %v1969 = vsel %vm848, %v1967, %v1968
      %v1970 = vrot.slane %v1951, 4
      %v1971 = vrot.slane %v1952, 4
      %v1972 = vsel %vm848, %v1970, %v1971
      %1973 = vrot.lane.b32.xlu0 %v1963, 124
      %v1974 = vpop.permute.xlu0 %1973
      %1975 = vrot.lane.b32.xlu0 %v1966, 124
      %v1976 = vpop.permute.xlu0 %1975
      %1977 = vrot.lane.b32.xlu0 %v1969, 124
      %v1978 = vpop.permute.xlu0 %1977
      %1979 = vrot.lane.b32.xlu0 %v1972, 124
      %v1980 = vpop.permute.xlu0 %1979
      %v1985 = vadd.f32 %v1925, %v1974
      %v1986 = vadd.f32 %v1926, %v1976
      %v1987 = vadd.f32 %v1927, %v1978
      %v1988 = vadd.f32 %v1928, %v1980
      %v1993 = vlaneseq
      %v1994 = vshrl.u32 %v1993, 7
      %v1995 = vsub.s32 0, %v1994
      %v1996 = vrot.slane %v601, %v1995
      %v1997 = vlaneseq
      %v1998 = vshrl.u32 %v1997, 7
      %v1999 = vsub.s32 0, %v1998
      %v2000 = vrot.slane %v602, %v1999
      %v2001 = vlaneseq
      %v2002 = vshrl.u32 %v2001, 7
      %v2003 = vsub.s32 0, %v2002
      %v2004 = vrot.slane %v603, %v2003
      %v2005 = vlaneseq
      %v2006 = vshrl.u32 %v2005, 7
      %v2007 = vsub.s32 0, %v2006
      %v2008 = vrot.slane %v604, %v2007
      %2009 = vset.pattern.permute.xlu0 0
      %2010 = vperm.xlu0 %2009, %v1996
      %v2011 = vpop.permute.xlu0 %2010
      %2013 = vset.pattern.permute.xlu0 0
      %2014 = vperm.xlu0 %2013, %v2000
      %v2015 = vpop.permute.xlu0 %2014
      %2017 = vset.pattern.permute.xlu0 0
      %2018 = vperm.xlu0 %2017, %v2004
      %v2019 = vpop.permute.xlu0 %2018
      %2021 = vset.pattern.permute.xlu0 0
      %2022 = vperm.xlu0 %2021, %v2008
      %v2023 = vpop.permute.xlu0 %2022
      %v2025 = vadd.f32 %v1985, %v2011
      %v2026 = vadd.f32 %v1986, %v2015
      %v2027 = vadd.f32 %v1987, %v2019
      %v2028 = vadd.f32 %v1988, %v2023
      %v2029 = vxor.u32 %v2025, 2147483648
      %v2030 = vxor.u32 %v2026, 2147483648
      %v2031 = vxor.u32 %v2027, 2147483648
      %v2032 = vxor.u32 %v2028, 2147483648
      %v2033 = vmul.f32 %v2029, 1.442695
      %v2034 = vpow.pop %v2033
      %v2035 = vmul.f32 %v2030, 1.442695
      %v2036 = vpow.pop %v2035
      %v2037 = vmul.f32 %v2031, 1.442695
      %v2038 = vpow.pop %v2037
      %v2039 = vmul.f32 %v2032, 1.442695
      %v2040 = vpow.pop %v2039
      %v2041 = vadd.f32 %v2034, 1.0
      %v2042 = vadd.f32 %v2036, 1.0
      %v2043 = vadd.f32 %v2038, 1.0
      %v2044 = vadd.f32 %v2040, 1.0
      %v2045 = vrcp.pop %v2041
      %v2046 = vmul.f32 1.0, %v2045
      %v2047 = vrcp.pop %v2042
      %v2048 = vmul.f32 1.0, %v2047
      %v2049 = vrcp.pop %v2043
      %v2050 = vmul.f32 1.0, %v2049
      %v2051 = vrcp.pop %v2044
      %v2052 = vmul.f32 1.0, %v2051
      %v2053 = vmul.f32 %v2025, %v2046
      %v2054 = vmul.f32 %v2026, %v2048
      %v2055 = vmul.f32 %v2027, %v2050
      %v2056 = vmul.f32 %v2028, %v2052
      %v2057 = vld [vmem:[#allocation2 + $0x4] sm:$0xff]
      %v2058 = vld [vmem:[#allocation2 + $0x14] sm:$0xff]
      %v2059 = vld [vmem:[#allocation2 + $0x24] sm:$0xff]
      %v2060 = vld [vmem:[#allocation2 + $0x34] sm:$0xff]
      %2065 = vrot.lane.b32.xlu0 %v2057, 126
      %v2066 = vpop.permute.xlu0 %2065
      %2067 = vrot.lane.b32.xlu0 %v2058, 126
      %v2068 = vpop.permute.xlu0 %2067
      %2069 = vrot.lane.b32.xlu0 %v2059, 126
      %v2070 = vpop.permute.xlu0 %2069
      %2071 = vrot.lane.b32.xlu0 %v2060, 126
      %v2072 = vpop.permute.xlu0 %2071
      %v2077 = vcombine.low %v2066, %v2070
      %v2078 = vcombine.high %v2066, %v2070
      %v2080 = vunpack.c.l.s4 1983009808
      %v2081 = vunpack.c.0.s8 %v2080
      %v2082 = vlaneseq
      %v2083 = vshrl.u32 %v2082, 7
      %v2084 = vsub.s32 %v2081, %v2083
      %v2085 = vrot.slane %v2077, %v2084
      %v2087 = vunpack.c.l.s4 1983009808
      %v2088 = vunpack.c.0.s8 %v2087
      %v2089 = vlaneseq
      %v2090 = vshrl.u32 %v2089, 7
      %v2091 = vsub.s32 %v2088, %v2090
      %v2092 = vrot.slane %v2078, %v2091
      %v2093 = vcombine.low %v2068, %v2072
      %v2094 = vcombine.high %v2068, %v2072
      %v2096 = vunpack.c.l.s4 1983009808
      %v2097 = vunpack.c.0.s8 %v2096
      %v2098 = vlaneseq
      %v2099 = vshrl.u32 %v2098, 7
      %v2100 = vsub.s32 %v2097, %v2099
      %v2101 = vrot.slane %v2093, %v2100
      %v2103 = vunpack.c.l.s4 1983009808
      %v2104 = vunpack.c.0.s8 %v2103
      %v2105 = vlaneseq
      %v2106 = vshrl.u32 %v2105, 7
      %v2107 = vsub.s32 %v2104, %v2106
      %v2108 = vrot.slane %v2094, %v2107
      %v2109 = vcombine.low %v2085, %v2101
      %v2110 = vcombine.high %v2085, %v2101
      %v2112 = vunpack.c.l.s4 1934713408
      %v2113 = vunpack.c.0.s8 %v2112
      %v2114 = vlaneseq
      %v2115 = vshrl.u32 %v2114, 7
      %v2116 = vsub.s32 %v2113, %v2115
      %v2117 = vrot.slane %v2109, %v2116
      %v2119 = vunpack.c.l.s4 1934713408
      %v2120 = vunpack.c.0.s8 %v2119
      %v2121 = vlaneseq
      %v2122 = vshrl.u32 %v2121, 7
      %v2123 = vsub.s32 %v2120, %v2122
      %v2124 = vrot.slane %v2110, %v2123
      %v2125 = vcombine.low %v2092, %v2108
      %v2126 = vcombine.high %v2092, %v2108
      %v2128 = vunpack.c.l.s4 1934713408
      %v2129 = vunpack.c.0.s8 %v2128
      %v2130 = vlaneseq
      %v2131 = vshrl.u32 %v2130, 7
      %v2132 = vsub.s32 %v2129, %v2131
      %v2133 = vrot.slane %v2125, %v2132
      %v2135 = vunpack.c.l.s4 1934713408
      %v2136 = vunpack.c.0.s8 %v2135
      %v2137 = vlaneseq
      %v2138 = vshrl.u32 %v2137, 7
      %v2139 = vsub.s32 %v2136, %v2138
      %v2140 = vrot.slane %v2126, %v2139
      %v2141 = vcombine.high %v2117, 0.0
      %v2142 = vcombine.high %v2124, 0.0
      %v2143 = vcombine.high %v2133, 0.0
      %v2144 = vcombine.high %v2140, 0.0
      %2146 = vrot.lane.b32.xlu0 %v2141, 16
      %v2147 = vpop.permute.xlu0 %2146
      %2150 = vrot.lane.b32.xlu0 %v2124, 32
      %v2151 = vpop.permute.xlu0 %2150
      %2154 = vrot.lane.b32.xlu0 %v2142, 48
      %v2155 = vpop.permute.xlu0 %2154
      %2158 = vrot.lane.b32.xlu0 %v2133, 64
      %v2159 = vpop.permute.xlu0 %2158
      %2162 = vrot.lane.b32.xlu0 %v2143, 80
      %v2163 = vpop.permute.xlu0 %2162
      %2166 = vrot.lane.b32.xlu0 %v2140, 96
      %v2167 = vpop.permute.xlu0 %2166
      %2170 = vrot.lane.b32.xlu0 %v2144, 112
      %v2171 = vpop.permute.xlu0 %2170
      %vm2173 = vcmask 130048
      %v2174 = vsel %vm2173, %v2117, %v2147
      %vm2175 = vcmask 261120
      %v2176 = vsel %vm2175, %v2174, %v2151
      %vm2177 = vcmask 392192
      %v2178 = vsel %vm2177, %v2176, %v2155
      %vm2179 = vcmask 523264
      %v2180 = vsel %vm2179, %v2178, %v2159
      %vm2181 = vcmask 654336
      %v2182 = vsel %vm2181, %v2180, %v2163
      %vm2183 = vcmask 785408
      %v2184 = vsel %vm2183, %v2182, %v2167
      %vm2185 = vcmask 916480
      %v2186 = vsel %vm2185, %v2184, %v2171
      %2187 = vst [vmem:[%s244] sm:$0xf] %v2186
      %v2188 = vcombine.low %v2053, %v2055
      %v2189 = vcombine.high %v2053, %v2055
      %v2191 = vunpack.c.l.s4 1983009808
      %v2192 = vunpack.c.0.s8 %v2191
      %v2193 = vlaneseq
      %v2194 = vshrl.u32 %v2193, 7
      %v2195 = vsub.s32 %v2192, %v2194
      %v2196 = vrot.slane %v2188, %v2195
      %v2198 = vunpack.c.l.s4 1983009808
      %v2199 = vunpack.c.0.s8 %v2198
      %v2200 = vlaneseq
      %v2201 = vshrl.u32 %v2200, 7
      %v2202 = vsub.s32 %v2199, %v2201
      %v2203 = vrot.slane %v2189, %v2202
      %v2204 = vcombine.low %v2054, %v2056
      %v2205 = vcombine.high %v2054, %v2056
      %v2207 = vunpack.c.l.s4 1983009808
      %v2208 = vunpack.c.0.s8 %v2207
      %v2209 = vlaneseq
      %v2210 = vshrl.u32 %v2209, 7
      %v2211 = vsub.s32 %v2208, %v2210
      %v2212 = vrot.slane %v2204, %v2211
      %v2214 = vunpack.c.l.s4 1983009808
      %v2215 = vunpack.c.0.s8 %v2214
      %v2216 = vlaneseq
      %v2217 = vshrl.u32 %v2216, 7
      %v2218 = vsub.s32 %v2215, %v2217
      %v2219 = vrot.slane %v2205, %v2218
      %v2220 = vcombine.low %v2196, %v2212
      %v2221 = vcombine.high %v2196, %v2212
      %v2223 = vunpack.c.l.s4 1934713408
      %v2224 = vunpack.c.0.s8 %v2223
      %v2225 = vlaneseq
      %v2226 = vshrl.u32 %v2225, 7
      %v2227 = vsub.s32 %v2224, %v2226
      %v2228 = vrot.slane %v2220, %v2227
      %v2230 = vunpack.c.l.s4 1934713408
      %v2231 = vunpack.c.0.s8 %v2230
      %v2232 = vlaneseq
      %v2233 = vshrl.u32 %v2232, 7
      %v2234 = vsub.s32 %v2231, %v2233
      %v2235 = vrot.slane %v2221, %v2234
      %v2236 = vcombine.low %v2203, %v2219
      %v2237 = vcombine.high %v2203, %v2219
      %v2239 = vunpack.c.l.s4 1934713408
      %v2240 = vunpack.c.0.s8 %v2239
      %v2241 = vlaneseq
      %v2242 = vshrl.u32 %v2241, 7
      %v2243 = vsub.s32 %v2240, %v2242
      %v2244 = vrot.slane %v2236, %v2243
      %v2246 = vunpack.c.l.s4 1934713408
      %v2247 = vunpack.c.0.s8 %v2246
      %v2248 = vlaneseq
      %v2249 = vshrl.u32 %v2248, 7
      %v2250 = vsub.s32 %v2247, %v2249
      %v2251 = vrot.slane %v2237, %v2250
      %v2252 = vcombine.high %v2228, 0.0
      %v2253 = vcombine.high %v2235, 0.0
      %v2254 = vcombine.high %v2244, 0.0
      %v2255 = vcombine.high %v2251, 0.0
      %2257 = vrot.lane.b32.xlu0 %v2252, 16
      %v2258 = vpop.permute.xlu0 %2257
      %2261 = vrot.lane.b32.xlu0 %v2235, 32
      %v2262 = vpop.permute.xlu0 %2261
      %2265 = vrot.lane.b32.xlu0 %v2253, 48
      %v2266 = vpop.permute.xlu0 %2265
      %2269 = vrot.lane.b32.xlu0 %v2244, 64
      %v2270 = vpop.permute.xlu0 %2269
      %2273 = vrot.lane.b32.xlu0 %v2254, 80
      %v2274 = vpop.permute.xlu0 %2273
      %2277 = vrot.lane.b32.xlu0 %v2251, 96
      %v2278 = vpop.permute.xlu0 %2277
      %2281 = vrot.lane.b32.xlu0 %v2255, 112
      %v2282 = vpop.permute.xlu0 %2281
      %v2284 = vsel %vm2173, %v2228, %v2258
      %v2285 = vsel %vm2175, %v2284, %v2262
      %v2286 = vsel %vm2177, %v2285, %v2266
      %v2287 = vsel %vm2179, %v2286, %v2270
      %v2288 = vsel %vm2181, %v2287, %v2274
      %v2289 = vsel %vm2183, %v2288, %v2278
      %v2290 = vsel %vm2185, %v2289, %v2282
      %2291 = vst [vmem:[%s244 + $0x4] sm:$0xf] %v2290
      %p2292 = scmp.lt.s32.totalorder %s20, 1
      %s2293 = scalar_select %p2292, %s20, 1
      %p2294 = scmp.lt.s32.totalorder %s21, 1
      %s2295 = scalar_select %p2294, %s21, 1
      %s2296 = smul.addr %s2293, 2
      %s2297 = sadd.s32 %s2295, %s2296
      %s2298 = smul.addr %s2297, 8
      %s2299 = scalar_lea.vmem %s5, %s2298
      // Predicated region
      $region49: #{ghost_conv.1} parent=39 // pred_check
        %p2300 = pneg %p158
      $region50: #{ghost_conv.1} parent=39 // pred_check_branch
        %2302 = sbr.rel (%p2300) target = $region52
      $region51: #{ghost_conv.1} parent=39 // pred_region
        _
      $region52: #{ghost_conv.1} parent=39 // pred_fallthru
        _
    $region40: #{ghost_conv.1} parent=5 // pred_fallthru
      _
    %p2303 = scmp.le.s32.totalorder 2, %s11
    // Predicated region
    $region53: #{ghost_conv.1} parent=5 // pred_check
      %p2304 = pneg %p2303
    $region54: #{ghost_conv.1} parent=5 // pred_check_branch
      %2306 = sbr.rel (%p2304) target = $region56
    $region55: #{ghost_conv.1} parent=5 // pred_region
      %s2307 = ssub.s32 %s11, 2
      // Predicated region
      $region57: #{ghost_conv.1} parent=55 // pred_check
        %p2308 = pneg %p164
      $region58: #{ghost_conv.1} parent=55 // pred_check_branch
        %2310 = sbr.rel (%p2308) target = $region60
      $region59: #{ghost_conv.1} parent=55 // pred_region
        %p2311 = scmp.lt.s32.totalorder %s22, 1
        %s2312 = scalar_select %p2311, %s22, 1
        %p2313 = scmp.lt.s32.totalorder %s23, 1
        %s2314 = scalar_select %p2313, %s23, 1
        %s2315 = smul.addr %s2312, 2
        %s2316 = sadd.s32 %s2314, %s2315
        %s2317 = smul.addr %s2316, 8
        %s2318 = scalar_lea.vmem %s5, %s2317
      $region60: #{ghost_conv.1} parent=55 // pred_fallthru
        _
    $region56: #{ghost_conv.1} parent=5 // pred_fallthru
      _
  $region6: #{ghost_conv.1} parent=0 // loop_footer
    %s15 = sadd.s32 1, %s11
  $region7: #{ghost_conv.1} parent=0 // loop_footer_branch
    %10 = sbr.rel target = $region3
  $region8: #{ghost_conv.1} parent=0 // loop_exit
    _

</llo_original>
